<compile_context>
chip_gen: v6e
topology: v6e:2x2x1
jax: 0.10.0
libtpu: 0.0.40
codegen_flags: <defaults>
</compile_context>

<pallas_src>
import functools

import jax
import jax.numpy as jnp
from jax.experimental import pallas as pl
from jax.experimental.pallas import tpu as pltpu

INPUT_SIZE = 200
HIDDEN_SIZE = 128
OUTPUT_SIZE = 4
OUT_PAD = 128  # lane-dense padded FC output width


def lstm_model_kernel(wsm_ref,                       # SMEM (3,)  softmax-ed mix weights
                      e1_ref, e2_ref, e3_ref,        # VMEM (tB, tS, I) f32 tiles
                      wih_ref,                       # VMEM (I, 4H)  bf16, gates [i,f,o,g]
                      whh_ref,                       # VMEM (H, 4H)  f32,  gates [i,f,o,g]
                      bias_ref,                      # VMEM (1, 4H)  f32 (b_ih + b_hh)
                      wfc_ref,                       # VMEM (H, OUT_PAD) f32 (zero padded)
                      bfc_ref,                       # VMEM (1, OUT_PAD) f32 (zero padded)
                      out_ref,                       # VMEM (tB, OUT_PAD) f32
                      h_ref, c_ref,                  # VMEM scratch (tB, H) f32
                      *, t_seq, hidden):
    s = pl.program_id(1)

    @pl.when(s == 0)
    def _():
        h_ref[...] = jnp.zeros_like(h_ref)
        c_ref[...] = jnp.zeros_like(c_ref)

    w0 = wsm_ref[0]
    w1 = wsm_ref[1]
    w2 = wsm_ref[2]

    t_batch = e1_ref.shape[0]
    in_dim = e1_ref.shape[2]
    h4 = 4 * hidden
    h3 = 3 * hidden

    # --- Phase 1: ELMO mix (f32, VPU) + batched input projection (bf16 MXU) -------
    x = w0 * e1_ref[...] + w1 * e2_ref[...] + w2 * e3_ref[...]      # (tB, tS, I) f32
    x2d = x.reshape(t_batch * t_seq, in_dim).astype(jnp.bfloat16)   # (tB*tS, I)
    proj = jnp.dot(x2d, wih_ref[...],
                   preferred_element_type=jnp.float32)              # (tB*tS, 4H) f32
    proj = proj + bias_ref[...]
    proj = proj.reshape(t_batch, t_seq, h4)                         # (tB, tS, 4H)

    # --- Phase 2: serial recurrence (small (tB,H)@(H,4H) matmul + gates) ----------
    whh = whh_ref[...]                                              # hoisted load
    h = h_ref[...]
    c = c_ref[...]
    for t in range(t_seq):  # fully unrolled: t_seq is a trace-time constant
        gates = proj[:, t, :] + jnp.dot(h, whh,
                                        preferred_element_type=jnp.float32)
        sig = jax.nn.sigmoid(gates[:, :h3])        # one contiguous sigmoid: i, f, o
        g_g = jnp.tanh(gates[:, h3:])              # one tanh: g
        i_g = sig[:, :hidden]
        f_g = sig[:, hidden:2 * hidden]
        o_g = sig[:, 2 * hidden:h3]
        c = f_g * c + i_g * g_g
        h = o_g * jnp.tanh(c)
    h_ref[...] = h
    c_ref[...] = c

    # --- Final Linear on the last hidden state (lane-padded to 128 columns) ------
    @pl.when(s == pl.num_programs(1) - 1)
    def _():
        out_ref[...] = (jnp.dot(h, wfc_ref[...],
                                preferred_element_type=jnp.float32)
                        + bfc_ref[...])


def _reorder_gates(w):
    """Permute the trailing 4H gate axis from PyTorch [i, f, g, o] to [i, f, o, g]."""
    i, f, g, o = jnp.split(w, 4, axis=-1)
    return jnp.concatenate([i, f, o, g], axis=-1)


def _pick_seq_tile(seq_len):
    # Tile must satisfy the (8, 128) rule on the second-minor dim: multiple of 8
    # or equal to the full sequence length, and must divide S evenly.
    if seq_len <= 32:
        return seq_len
    for cand in (32, 16, 8):
        if seq_len % cand == 0:
            return cand
    return seq_len


def _pick_batch_tile(batch):
    if batch <= 64:
        return batch
    for cand in (64, 32, 16, 8):
        if batch % cand == 0:
            return cand
    return batch


@jax.jit
def lstm_model_forward(params, e1, e2, e3):
    B, S, I = e1.shape
    H = params["w_hh"].shape[1]
    O = params["w_fc"].shape[0]
    H4 = 4 * H

    # Parameter glue (cold path): softmax of the 3 mix weights, gate reorder,
    # bias fusion, transposes and padding of the tiny FC.
    w_softmax = jax.nn.softmax(params["weights"]).astype(jnp.float32)

    wih_t = _reorder_gates(params["w_ih"].T).astype(jnp.bfloat16)      # (I, 4H) bf16
    whh_t = _reorder_gates(params["w_hh"].T).astype(jnp.float32)       # (H, 4H) f32
    bias = _reorder_gates(params["b_ih"] + params["b_hh"])
    bias = bias.reshape(1, H4).astype(jnp.float32)                     # (1, 4H)

    wfc_pad = jnp.zeros((H, OUT_PAD), jnp.float32).at[:, :O].set(params["w_fc"].T)
    bfc_pad = jnp.zeros((1, OUT_PAD), jnp.float32).at[:, :O].set(params["b_fc"][None, :])

    tS = _pick_seq_tile(S)
    tB = _pick_batch_tile(B)
    grid = (B // tB, S // tS)

    kernel = functools.partial(lstm_model_kernel, t_seq=tS, hidden=H)

    e_spec = pl.BlockSpec((tB, tS, I), lambda b, s, w: (b, s, 0))
    full = lambda shape: pl.BlockSpec(shape, lambda b, s, w: (0, 0))

    out_pad = pl.pallas_call(
        kernel,
        out_shape=jax.ShapeDtypeStruct((B, OUT_PAD), jnp.float32),
        grid_spec=pltpu.PrefetchScalarGridSpec(
            num_scalar_prefetch=1,
            grid=grid,
            in_specs=[
                e_spec, e_spec, e_spec,          # e1, e2, e3 tiles (auto double-buffered)
                full((I, H4)),                   # W_ih^T (bf16)
                full((H, H4)),                   # W_hh^T (f32)
                full((1, H4)),                   # fused bias
                full((H, OUT_PAD)),              # fc.weight^T, lane padded
                full((1, OUT_PAD)),              # fc.bias, lane padded
            ],
            out_specs=pl.BlockSpec((tB, OUT_PAD), lambda b, s, w: (b, 0)),
            scratch_shapes=[pltpu.VMEM((tB, H), jnp.float32),   # h carry
                            pltpu.VMEM((tB, H), jnp.float32)],  # c carry
        ),
        compiler_params=pltpu.CompilerParams(
            dimension_semantics=("parallel", "arbitrary"),
            vmem_limit_bytes=32 * 1024 * 1024),
    )(w_softmax,
      e1.astype(jnp.float32), e2.astype(jnp.float32), e3.astype(jnp.float32),
      wih_t, whh_t, bias, wfc_pad, bfc_pad)

    return out_pad[:, :O]


def init_params(key, input_size=INPUT_SIZE, hidden_size=HIDDEN_SIZE,
                output_size=OUTPUT_SIZE):
    """Deterministic synthetic parameters matching the PyTorch module shapes."""
    k = jax.random.split(key, 6)
    scale = 0.08
    return {
        "weights": jnp.array([0.33, 0.33, 0.33], jnp.float32),
        "w_ih": scale * jax.random.normal(k[0], (4 * hidden_size, input_size), jnp.float32),
        "w_hh": scale * jax.random.normal(k[1], (4 * hidden_size, hidden_size), jnp.float32),
        "b_ih": scale * jax.random.normal(k[2], (4 * hidden_size,), jnp.float32),
        "b_hh": scale * jax.random.normal(k[3], (4 * hidden_size,), jnp.float32),
        "w_fc": scale * jax.random.normal(k[4], (output_size, hidden_size), jnp.float32),
        "b_fc": scale * jax.random.normal(k[5], (output_size,), jnp.float32),
    }


def lstm_model_forward_ref(params, e1, e2, e3):
    """Pure-JAX f32 reference (PyTorch gate order i, f, g, o)."""
    w = jax.nn.softmax(params["weights"])
    x = w[0] * e1 + w[1] * e2 + w[2] * e3          # (B, S, I)
    B, S, _ = x.shape
    H = params["w_hh"].shape[1]
    h = jnp.zeros((B, H), jnp.float32)
    c = jnp.zeros((B, H), jnp.float32)
    for t in range(S):
        gates = x[:, t, :] @ params["w_ih"].T + params["b_ih"] \
            + h @ params["w_hh"].T + params["b_hh"]
        i_g = jax.nn.sigmoid(gates[:, 0 * H:1 * H])
        f_g = jax.nn.sigmoid(gates[:, 1 * H:2 * H])
        g_g = jnp.tanh(gates[:, 2 * H:3 * H])
        o_g = jax.nn.sigmoid(gates[:, 3 * H:4 * H])
        c = f_g * c + i_g * g_g
        h = o_g * jnp.tanh(c)
    return h @ params["w_fc"].T + params["b_fc"]


if __name__ == "__main__":
    key = jax.random.PRNGKey(0)
    k_param, k1, k2, k3 = jax.random.split(key, 4)

    batch, seq = 2, 8
    params = init_params(k_param)

    e1 = jax.random.normal(k1, (batch, seq, INPUT_SIZE), jnp.float32)
    e2 = jax.random.normal(k2, (batch, seq, INPUT_SIZE), jnp.float32)
    e3 = jax.random.normal(k3, (batch, seq, INPUT_SIZE), jnp.float32)

    out = lstm_model_forward(params, e1, e2, e3)
    out = jax.block_until_ready(out)

    ref = lstm_model_forward_ref(params, e1, e2, e3)
    assert out.shape == (batch, OUTPUT_SIZE)
    # Tolerance accounts for bf16 MXU operands on the input-projection GEMM.
    assert jnp.allclose(out, ref, rtol=2e-2, atol=2e-2), (out, ref)

    print("KERNEL_OK")
</pallas_src>

<mosaic_0001>
module attributes {stable_mosaic.version = 11 : i64} {
  func.func @lstm_model_kernel(%arg0: i32, %arg1: i32, %arg2: memref<3xf32, #tpu.memory_space<smem>>, %arg3: memref<2x8x200xf32, #tpu.memory_space<vmem>>, %arg4: memref<2x8x200xf32, #tpu.memory_space<vmem>>, %arg5: memref<2x8x200xf32, #tpu.memory_space<vmem>>, %arg6: memref<200x512xbf16, #tpu.memory_space<vmem>>, %arg7: memref<128x512xf32, #tpu.memory_space<vmem>>, %arg8: memref<1x512xf32, #tpu.memory_space<vmem>>, %arg9: memref<128x128xf32, #tpu.memory_space<vmem>>, %arg10: memref<1x128xf32, #tpu.memory_space<vmem>>, %arg11: memref<2x128xf32, #tpu.memory_space<vmem>>, %arg12: memref<2x128xf32, #tpu.memory_space<vmem>>, %arg13: memref<2x128xf32, #tpu.memory_space<vmem>>) attributes {dimension_semantics = [#tpu.dimension_semantics<parallel>, #tpu.dimension_semantics<arbitrary>], iteration_bounds = array<i64: 1, 1>, scalar_prefetch = 1 : i64, scratch_operands = 2 : i64, tpu.core_type = #tpu.core_type<tc>, window_params = [{transform_indices = @transform_0, window_bounds = array<i64: 2, 8, 200>}, {transform_indices = @transform_1, window_bounds = array<i64: 2, 8, 200>}, {transform_indices = @transform_2, window_bounds = array<i64: 2, 8, 200>}, {pipeline_mode = #tpu.pipeline_mode<synchronous>, transform_indices = @transform_3, window_bounds = array<i64: 200, 512>}, {pipeline_mode = #tpu.pipeline_mode<synchronous>, transform_indices = @transform_4, window_bounds = array<i64: 128, 512>}, {pipeline_mode = #tpu.pipeline_mode<synchronous>, transform_indices = @transform_5, window_bounds = array<i64: 1, 512>}, {pipeline_mode = #tpu.pipeline_mode<synchronous>, transform_indices = @transform_6, window_bounds = array<i64: 128, 128>}, {pipeline_mode = #tpu.pipeline_mode<synchronous>, transform_indices = @transform_7, window_bounds = array<i64: 1, 128>}, {transform_indices = @transform_8, window_bounds = array<i64: 2, 128>}]} {
    %c0_i32 = arith.constant 0 : i32
    %0 = arith.cmpi eq, %arg1, %c0_i32 : i32
    %1 = arith.extui %0 : i1 to i32
    %c0_i32_0 = arith.constant 0 : i32
    %2 = arith.cmpi ne, %1, %c0_i32_0 : i32
    scf.if %2 {
      %cst_42 = arith.constant 0.000000e+00 : f32
      %193 = vector.broadcast %cst_42 : f32 to vector<2x128xf32>
      %c0_43 = arith.constant 0 : index
      %c0_44 = arith.constant 0 : index
      %194 = vector.load %arg12[%c0_43, %c0_44] : memref<2x128xf32, #tpu.memory_space<vmem>>, vector<2x128xf32>
      tpu.vector_store %arg12[%c0_43, %c0_44], %193 {strides = array<i32>} : memref<2x128xf32, #tpu.memory_space<vmem>>, vector<2x128xf32>,
      %cst_45 = arith.constant 0.000000e+00 : f32
      %195 = vector.broadcast %cst_45 : f32 to vector<2x128xf32>
      %c0_46 = arith.constant 0 : index
      %c0_47 = arith.constant 0 : index
      %196 = vector.load %arg13[%c0_46, %c0_47] : memref<2x128xf32, #tpu.memory_space<vmem>>, vector<2x128xf32>
      tpu.vector_store %arg13[%c0_46, %c0_47], %195 {strides = array<i32>} : memref<2x128xf32, #tpu.memory_space<vmem>>, vector<2x128xf32>,
    } else {
    }
    %c0 = arith.constant 0 : index
    %3 = memref.load %arg2[%c0] : memref<3xf32, #tpu.memory_space<smem>>
    %c1 = arith.constant 1 : index
    %4 = memref.load %arg2[%c1] : memref<3xf32, #tpu.memory_space<smem>>
    %c2 = arith.constant 2 : index
    %5 = memref.load %arg2[%c2] : memref<3xf32, #tpu.memory_space<smem>>
    %c0_1 = arith.constant 0 : index
    %c0_2 = arith.constant 0 : index
    %c0_3 = arith.constant 0 : index
    %6 = vector.load %arg3[%c0_1, %c0_2, %c0_3] : memref<2x8x200xf32, #tpu.memory_space<vmem>>, vector<2x8x200xf32>
    %7 = vector.broadcast %3 : f32 to vector<2x8x200xf32>
    %8 = arith.mulf %7, %6 : vector<2x8x200xf32>
    %c0_4 = arith.constant 0 : index
    %c0_5 = arith.constant 0 : index
    %c0_6 = arith.constant 0 : index
    %9 = vector.load %arg4[%c0_4, %c0_5, %c0_6] : memref<2x8x200xf32, #tpu.memory_space<vmem>>, vector<2x8x200xf32>
    %10 = vector.broadcast %4 : f32 to vector<2x8x200xf32>
    %11 = arith.mulf %10, %9 : vector<2x8x200xf32>
    %12 = arith.addf %8, %11 : vector<2x8x200xf32>
    %c0_7 = arith.constant 0 : index
    %c0_8 = arith.constant 0 : index
    %c0_9 = arith.constant 0 : index
    %13 = vector.load %arg5[%c0_7, %c0_8, %c0_9] : memref<2x8x200xf32, #tpu.memory_space<vmem>>, vector<2x8x200xf32>
    %14 = vector.broadcast %5 : f32 to vector<2x8x200xf32>
    %15 = arith.mulf %14, %13 : vector<2x8x200xf32>
    %16 = arith.addf %12, %15 : vector<2x8x200xf32>
    %17 = vector.shape_cast %16 : vector<2x8x200xf32> to vector<16x200xf32>
    %18 = arith.truncf %17 : vector<16x200xf32> to vector<16x200xbf16>
    %c0_10 = arith.constant 0 : index
    %c0_11 = arith.constant 0 : index
    %19 = vector.load %arg6[%c0_10, %c0_11] : memref<200x512xbf16, #tpu.memory_space<vmem>>, vector<200x512xbf16>
    %cst = arith.constant dense<0.000000e+00> : vector<16x512xf32>
    %20 = tpu.matmul %18, %19, %cst {dimension_numbers = #tpu.dot_dimension_numbers<[1], [0], [0], [1], [0, 0, 1, 1], [], []>} : vector<16x200xbf16>, vector<200x512xbf16>, vector<16x512xf32> -> vector<16x512xf32>
    %c0_12 = arith.constant 0 : index
    %c0_13 = arith.constant 0 : index
    %21 = vector.load %arg8[%c0_12, %c0_13] : memref<1x512xf32, #tpu.memory_space<vmem>>, vector<1x512xf32>
    %22 = vector.broadcast %21 : vector<1x512xf32> to vector<16x512xf32>
    %23 = arith.addf %20, %22 : vector<16x512xf32>
    %24 = vector.shape_cast %23 : vector<16x512xf32> to vector<2x8x512xf32>
    %c0_14 = arith.constant 0 : index
    %c0_15 = arith.constant 0 : index
    %25 = vector.load %arg7[%c0_14, %c0_15] : memref<128x512xf32, #tpu.memory_space<vmem>>, vector<128x512xf32>
    %c0_16 = arith.constant 0 : index
    %c0_17 = arith.constant 0 : index
    %26 = vector.load %arg12[%c0_16, %c0_17] : memref<2x128xf32, #tpu.memory_space<vmem>>, vector<2x128xf32>
    %c0_18 = arith.constant 0 : index
    %c0_19 = arith.constant 0 : index
    %27 = vector.load %arg13[%c0_18, %c0_19] : memref<2x128xf32, #tpu.memory_space<vmem>>, vector<2x128xf32>
    %28 = vector.extract_strided_slice %24 {offsets = [0, 0, 0], sizes = [2, 1, 512], strides = [1, 1, 1]} : vector<2x8x512xf32> to vector<2x1x512xf32>
    %29 = vector.shape_cast %28 : vector<2x1x512xf32> to vector<2x512xf32>
    %cst_20 = arith.constant dense<0.000000e+00> : vector<2x512xf32>
    %30 = tpu.matmul %26, %25, %cst_20 {dimension_numbers = #tpu.dot_dimension_numbers<[1], [0], [0], [1], [0, 0, 1, 1], [], []>} : vector<2x128xf32>, vector<128x512xf32>, vector<2x512xf32> -> vector<2x512xf32>
    %31 = arith.addf %29, %30 : vector<2x512xf32>
    %32 = vector.extract_strided_slice %31 {offsets = [0, 0], sizes = [2, 384], strides = [1, 1]} : vector<2x512xf32> to vector<2x384xf32>
    %33 = arith.negf %32 : vector<2x384xf32>
    %34 = math.exp %33 : vector<2x384xf32>
    %cst_21 = arith.constant 1.000000e+00 : f32
    %35 = vector.broadcast %cst_21 : f32 to vector<2x384xf32>
    %36 = arith.addf %35, %34 : vector<2x384xf32>
    %37 = arith.divf %35, %36 : vector<2x384xf32>
    %38 = vector.extract_strided_slice %31 {offsets = [0, 384], sizes = [2, 128], strides = [1, 1]} : vector<2x512xf32> to vector<2x128xf32>
    %39 = math.tanh %38 : vector<2x128xf32>
    %40 = vector.extract_strided_slice %37 {offsets = [0, 0], sizes = [2, 128], strides = [1, 1]} : vector<2x384xf32> to vector<2x128xf32>
    %41 = vector.extract_strided_slice %37 {offsets = [0, 128], sizes = [2, 128], strides = [1, 1]} : vector<2x384xf32> to vector<2x128xf32>
    %42 = vector.extract_strided_slice %37 {offsets = [0, 256], sizes = [2, 128], strides = [1, 1]} : vector<2x384xf32> to vector<2x128xf32>
    %43 = arith.mulf %41, %27 : vector<2x128xf32>
    %44 = arith.mulf %40, %39 : vector<2x128xf32>
    %45 = arith.addf %43, %44 : vector<2x128xf32>
    %46 = math.tanh %45 : vector<2x128xf32>
    %47 = arith.mulf %42, %46 : vector<2x128xf32>
    %48 = vector.extract_strided_slice %24 {offsets = [0, 1, 0], sizes = [2, 1, 512], strides = [1, 1, 1]} : vector<2x8x512xf32> to vector<2x1x512xf32>
    %49 = vector.shape_cast %48 : vector<2x1x512xf32> to vector<2x512xf32>
    %cst_22 = arith.constant dense<0.000000e+00> : vector<2x512xf32>
    %50 = tpu.matmul %47, %25, %cst_22 {dimension_numbers = #tpu.dot_dimension_numbers<[1], [0], [0], [1], [0, 0, 1, 1], [], []>} : vector<2x128xf32>, vector<128x512xf32>, vector<2x512xf32> -> vector<2x512xf32>
    %51 = arith.addf %49, %50 : vector<2x512xf32>
    %52 = vector.extract_strided_slice %51 {offsets = [0, 0], sizes = [2, 384], strides = [1, 1]} : vector<2x512xf32> to vector<2x384xf32>
    %53 = arith.negf %52 : vector<2x384xf32>
    %54 = math.exp %53 : vector<2x384xf32>
    %cst_23 = arith.constant 1.000000e+00 : f32
    %55 = vector.broadcast %cst_23 : f32 to vector<2x384xf32>
    %56 = arith.addf %55, %54 : vector<2x384xf32>
    %57 = arith.divf %55, %56 : vector<2x384xf32>
    %58 = vector.extract_strided_slice %51 {offsets = [0, 384], sizes = [2, 128], strides = [1, 1]} : vector<2x512xf32> to vector<2x128xf32>
    %59 = math.tanh %58 : vector<2x128xf32>
    %60 = vector.extract_strided_slice %57 {offsets = [0, 0], sizes = [2, 128], strides = [1, 1]} : vector<2x384xf32> to vector<2x128xf32>
    %61 = vector.extract_strided_slice %57 {offsets = [0, 128], sizes = [2, 128], strides = [1, 1]} : vector<2x384xf32> to vector<2x128xf32>
    %62 = vector.extract_strided_slice %57 {offsets = [0, 256], sizes = [2, 128], strides = [1, 1]} : vector<2x384xf32> to vector<2x128xf32>
    %63 = arith.mulf %61, %45 : vector<2x128xf32>
    %64 = arith.mulf %60, %59 : vector<2x128xf32>
    %65 = arith.addf %63, %64 : vector<2x128xf32>
    %66 = math.tanh %65 : vector<2x128xf32>
    %67 = arith.mulf %62, %66 : vector<2x128xf32>
    %68 = vector.extract_strided_slice %24 {offsets = [0, 2, 0], sizes = [2, 1, 512], strides = [1, 1, 1]} : vector<2x8x512xf32> to vector<2x1x512xf32>
    %69 = vector.shape_cast %68 : vector<2x1x512xf32> to vector<2x512xf32>
    %cst_24 = arith.constant dense<0.000000e+00> : vector<2x512xf32>
    %70 = tpu.matmul %67, %25, %cst_24 {dimension_numbers = #tpu.dot_dimension_numbers<[1], [0], [0], [1], [0, 0, 1, 1], [], []>} : vector<2x128xf32>, vector<128x512xf32>, vector<2x512xf32> -> vector<2x512xf32>
    %71 = arith.addf %69, %70 : vector<2x512xf32>
    %72 = vector.extract_strided_slice %71 {offsets = [0, 0], sizes = [2, 384], strides = [1, 1]} : vector<2x512xf32> to vector<2x384xf32>
    %73 = arith.negf %72 : vector<2x384xf32>
    %74 = math.exp %73 : vector<2x384xf32>
    %cst_25 = arith.constant 1.000000e+00 : f32
    %75 = vector.broadcast %cst_25 : f32 to vector<2x384xf32>
    %76 = arith.addf %75, %74 : vector<2x384xf32>
    %77 = arith.divf %75, %76 : vector<2x384xf32>
    %78 = vector.extract_strided_slice %71 {offsets = [0, 384], sizes = [2, 128], strides = [1, 1]} : vector<2x512xf32> to vector<2x128xf32>
    %79 = math.tanh %78 : vector<2x128xf32>
    %80 = vector.extract_strided_slice %77 {offsets = [0, 0], sizes = [2, 128], strides = [1, 1]} : vector<2x384xf32> to vector<2x128xf32>
    %81 = vector.extract_strided_slice %77 {offsets = [0, 128], sizes = [2, 128], strides = [1, 1]} : vector<2x384xf32> to vector<2x128xf32>
    %82 = vector.extract_strided_slice %77 {offsets = [0, 256], sizes = [2, 128], strides = [1, 1]} : vector<2x384xf32> to vector<2x128xf32>
    %83 = arith.mulf %81, %65 : vector<2x128xf32>
    %84 = arith.mulf %80, %79 : vector<2x128xf32>
    %85 = arith.addf %83, %84 : vector<2x128xf32>
    %86 = math.tanh %85 : vector<2x128xf32>
    %87 = arith.mulf %82, %86 : vector<2x128xf32>
    %88 = vector.extract_strided_slice %24 {offsets = [0, 3, 0], sizes = [2, 1, 512], strides = [1, 1, 1]} : vector<2x8x512xf32> to vector<2x1x512xf32>
    %89 = vector.shape_cast %88 : vector<2x1x512xf32> to vector<2x512xf32>
    %cst_26 = arith.constant dense<0.000000e+00> : vector<2x512xf32>
    %90 = tpu.matmul %87, %25, %cst_26 {dimension_numbers = #tpu.dot_dimension_numbers<[1], [0], [0], [1], [0, 0, 1, 1], [], []>} : vector<2x128xf32>, vector<128x512xf32>, vector<2x512xf32> -> vector<2x512xf32>
    %91 = arith.addf %89, %90 : vector<2x512xf32>
    %92 = vector.extract_strided_slice %91 {offsets = [0, 0], sizes = [2, 384], strides = [1, 1]} : vector<2x512xf32> to vector<2x384xf32>
    %93 = arith.negf %92 : vector<2x384xf32>
    %94 = math.exp %93 : vector<2x384xf32>
    %cst_27 = arith.constant 1.000000e+00 : f32
    %95 = vector.broadcast %cst_27 : f32 to vector<2x384xf32>
    %96 = arith.addf %95, %94 : vector<2x384xf32>
    %97 = arith.divf %95, %96 : vector<2x384xf32>
    %98 = vector.extract_strided_slice %91 {offsets = [0, 384], sizes = [2, 128], strides = [1, 1]} : vector<2x512xf32> to vector<2x128xf32>
    %99 = math.tanh %98 : vector<2x128xf32>
    %100 = vector.extract_strided_slice %97 {offsets = [0, 0], sizes = [2, 128], strides = [1, 1]} : vector<2x384xf32> to vector<2x128xf32>
    %101 = vector.extract_strided_slice %97 {offsets = [0, 128], sizes = [2, 128], strides = [1, 1]} : vector<2x384xf32> to vector<2x128xf32>
    %102 = vector.extract_strided_slice %97 {offsets = [0, 256], sizes = [2, 128], strides = [1, 1]} : vector<2x384xf32> to vector<2x128xf32>
    %103 = arith.mulf %101, %85 : vector<2x128xf32>
    %104 = arith.mulf %100, %99 : vector<2x128xf32>
    %105 = arith.addf %103, %104 : vector<2x128xf32>
    %106 = math.tanh %105 : vector<2x128xf32>
    %107 = arith.mulf %102, %106 : vector<2x128xf32>
    %108 = vector.extract_strided_slice %24 {offsets = [0, 4, 0], sizes = [2, 1, 512], strides = [1, 1, 1]} : vector<2x8x512xf32> to vector<2x1x512xf32>
    %109 = vector.shape_cast %108 : vector<2x1x512xf32> to vector<2x512xf32>
    %cst_28 = arith.constant dense<0.000000e+00> : vector<2x512xf32>
    %110 = tpu.matmul %107, %25, %cst_28 {dimension_numbers = #tpu.dot_dimension_numbers<[1], [0], [0], [1], [0, 0, 1, 1], [], []>} : vector<2x128xf32>, vector<128x512xf32>, vector<2x512xf32> -> vector<2x512xf32>
    %111 = arith.addf %109, %110 : vector<2x512xf32>
    %112 = vector.extract_strided_slice %111 {offsets = [0, 0], sizes = [2, 384], strides = [1, 1]} : vector<2x512xf32> to vector<2x384xf32>
    %113 = arith.negf %112 : vector<2x384xf32>
    %114 = math.exp %113 : vector<2x384xf32>
    %cst_29 = arith.constant 1.000000e+00 : f32
    %115 = vector.broadcast %cst_29 : f32 to vector<2x384xf32>
    %116 = arith.addf %115, %114 : vector<2x384xf32>
    %117 = arith.divf %115, %116 : vector<2x384xf32>
    %118 = vector.extract_strided_slice %111 {offsets = [0, 384], sizes = [2, 128], strides = [1, 1]} : vector<2x512xf32> to vector<2x128xf32>
    %119 = math.tanh %118 : vector<2x128xf32>
    %120 = vector.extract_strided_slice %117 {offsets = [0, 0], sizes = [2, 128], strides = [1, 1]} : vector<2x384xf32> to vector<2x128xf32>
    %121 = vector.extract_strided_slice %117 {offsets = [0, 128], sizes = [2, 128], strides = [1, 1]} : vector<2x384xf32> to vector<2x128xf32>
    %122 = vector.extract_strided_slice %117 {offsets = [0, 256], sizes = [2, 128], strides = [1, 1]} : vector<2x384xf32> to vector<2x128xf32>
    %123 = arith.mulf %121, %105 : vector<2x128xf32>
    %124 = arith.mulf %120, %119 : vector<2x128xf32>
    %125 = arith.addf %123, %124 : vector<2x128xf32>
    %126 = math.tanh %125 : vector<2x128xf32>
    %127 = arith.mulf %122, %126 : vector<2x128xf32>
    %128 = vector.extract_strided_slice %24 {offsets = [0, 5, 0], sizes = [2, 1, 512], strides = [1, 1, 1]} : vector<2x8x512xf32> to vector<2x1x512xf32>
    %129 = vector.shape_cast %128 : vector<2x1x512xf32> to vector<2x512xf32>
    %cst_30 = arith.constant dense<0.000000e+00> : vector<2x512xf32>
    %130 = tpu.matmul %127, %25, %cst_30 {dimension_numbers = #tpu.dot_dimension_numbers<[1], [0], [0], [1], [0, 0, 1, 1], [], []>} : vector<2x128xf32>, vector<128x512xf32>, vector<2x512xf32> -> vector<2x512xf32>
    %131 = arith.addf %129, %130 : vector<2x512xf32>
    %132 = vector.extract_strided_slice %131 {offsets = [0, 0], sizes = [2, 384], strides = [1, 1]} : vector<2x512xf32> to vector<2x384xf32>
    %133 = arith.negf %132 : vector<2x384xf32>
    %134 = math.exp %133 : vector<2x384xf32>
    %cst_31 = arith.constant 1.000000e+00 : f32
    %135 = vector.broadcast %cst_31 : f32 to vector<2x384xf32>
    %136 = arith.addf %135, %134 : vector<2x384xf32>
    %137 = arith.divf %135, %136 : vector<2x384xf32>
    %138 = vector.extract_strided_slice %131 {offsets = [0, 384], sizes = [2, 128], strides = [1, 1]} : vector<2x512xf32> to vector<2x128xf32>
    %139 = math.tanh %138 : vector<2x128xf32>
    %140 = vector.extract_strided_slice %137 {offsets = [0, 0], sizes = [2, 128], strides = [1, 1]} : vector<2x384xf32> to vector<2x128xf32>
    %141 = vector.extract_strided_slice %137 {offsets = [0, 128], sizes = [2, 128], strides = [1, 1]} : vector<2x384xf32> to vector<2x128xf32>
    %142 = vector.extract_strided_slice %137 {offsets = [0, 256], sizes = [2, 128], strides = [1, 1]} : vector<2x384xf32> to vector<2x128xf32>
    %143 = arith.mulf %141, %125 : vector<2x128xf32>
    %144 = arith.mulf %140, %139 : vector<2x128xf32>
    %145 = arith.addf %143, %144 : vector<2x128xf32>
    %146 = math.tanh %145 : vector<2x128xf32>
    %147 = arith.mulf %142, %146 : vector<2x128xf32>
    %148 = vector.extract_strided_slice %24 {offsets = [0, 6, 0], sizes = [2, 1, 512], strides = [1, 1, 1]} : vector<2x8x512xf32> to vector<2x1x512xf32>
    %149 = vector.shape_cast %148 : vector<2x1x512xf32> to vector<2x512xf32>
    %cst_32 = arith.constant dense<0.000000e+00> : vector<2x512xf32>
    %150 = tpu.matmul %147, %25, %cst_32 {dimension_numbers = #tpu.dot_dimension_numbers<[1], [0], [0], [1], [0, 0, 1, 1], [], []>} : vector<2x128xf32>, vector<128x512xf32>, vector<2x512xf32> -> vector<2x512xf32>
    %151 = arith.addf %149, %150 : vector<2x512xf32>
    %152 = vector.extract_strided_slice %151 {offsets = [0, 0], sizes = [2, 384], strides = [1, 1]} : vector<2x512xf32> to vector<2x384xf32>
    %153 = arith.negf %152 : vector<2x384xf32>
    %154 = math.exp %153 : vector<2x384xf32>
    %cst_33 = arith.constant 1.000000e+00 : f32
    %155 = vector.broadcast %cst_33 : f32 to vector<2x384xf32>
    %156 = arith.addf %155, %154 : vector<2x384xf32>
    %157 = arith.divf %155, %156 : vector<2x384xf32>
    %158 = vector.extract_strided_slice %151 {offsets = [0, 384], sizes = [2, 128], strides = [1, 1]} : vector<2x512xf32> to vector<2x128xf32>
    %159 = math.tanh %158 : vector<2x128xf32>
    %160 = vector.extract_strided_slice %157 {offsets = [0, 0], sizes = [2, 128], strides = [1, 1]} : vector<2x384xf32> to vector<2x128xf32>
    %161 = vector.extract_strided_slice %157 {offsets = [0, 128], sizes = [2, 128], strides = [1, 1]} : vector<2x384xf32> to vector<2x128xf32>
    %162 = vector.extract_strided_slice %157 {offsets = [0, 256], sizes = [2, 128], strides = [1, 1]} : vector<2x384xf32> to vector<2x128xf32>
    %163 = arith.mulf %161, %145 : vector<2x128xf32>
    %164 = arith.mulf %160, %159 : vector<2x128xf32>
    %165 = arith.addf %163, %164 : vector<2x128xf32>
    %166 = math.tanh %165 : vector<2x128xf32>
    %167 = arith.mulf %162, %166 : vector<2x128xf32>
    %168 = vector.extract_strided_slice %24 {offsets = [0, 7, 0], sizes = [2, 1, 512], strides = [1, 1, 1]} : vector<2x8x512xf32> to vector<2x1x512xf32>
    %169 = vector.shape_cast %168 : vector<2x1x512xf32> to vector<2x512xf32>
    %cst_34 = arith.constant dense<0.000000e+00> : vector<2x512xf32>
    %170 = tpu.matmul %167, %25, %cst_34 {dimension_numbers = #tpu.dot_dimension_numbers<[1], [0], [0], [1], [0, 0, 1, 1], [], []>} : vector<2x128xf32>, vector<128x512xf32>, vector<2x512xf32> -> vector<2x512xf32>
    %171 = arith.addf %169, %170 : vector<2x512xf32>
    %172 = vector.extract_strided_slice %171 {offsets = [0, 0], sizes = [2, 384], strides = [1, 1]} : vector<2x512xf32> to vector<2x384xf32>
    %173 = arith.negf %172 : vector<2x384xf32>
    %174 = math.exp %173 : vector<2x384xf32>
    %cst_35 = arith.constant 1.000000e+00 : f32
    %175 = vector.broadcast %cst_35 : f32 to vector<2x384xf32>
    %176 = arith.addf %175, %174 : vector<2x384xf32>
    %177 = arith.divf %175, %176 : vector<2x384xf32>
    %178 = vector.extract_strided_slice %171 {offsets = [0, 384], sizes = [2, 128], strides = [1, 1]} : vector<2x512xf32> to vector<2x128xf32>
    %179 = math.tanh %178 : vector<2x128xf32>
    %180 = vector.extract_strided_slice %177 {offsets = [0, 0], sizes = [2, 128], strides = [1, 1]} : vector<2x384xf32> to vector<2x128xf32>
    %181 = vector.extract_strided_slice %177 {offsets = [0, 128], sizes = [2, 128], strides = [1, 1]} : vector<2x384xf32> to vector<2x128xf32>
    %182 = vector.extract_strided_slice %177 {offsets = [0, 256], sizes = [2, 128], strides = [1, 1]} : vector<2x384xf32> to vector<2x128xf32>
    %183 = arith.mulf %181, %165 : vector<2x128xf32>
    %184 = arith.mulf %180, %179 : vector<2x128xf32>
    %185 = arith.addf %183, %184 : vector<2x128xf32>
    %186 = math.tanh %185 : vector<2x128xf32>
    %187 = arith.mulf %182, %186 : vector<2x128xf32>
    %c0_36 = arith.constant 0 : index
    %c0_37 = arith.constant 0 : index
    %188 = vector.load %arg12[%c0_36, %c0_37] : memref<2x128xf32, #tpu.memory_space<vmem>>, vector<2x128xf32>
    tpu.vector_store %arg12[%c0_36, %c0_37], %187 {strides = array<i32>} : memref<2x128xf32, #tpu.memory_space<vmem>>, vector<2x128xf32>,
    %c0_38 = arith.constant 0 : index
    %c0_39 = arith.constant 0 : index
    %189 = vector.load %arg13[%c0_38, %c0_39] : memref<2x128xf32, #tpu.memory_space<vmem>>, vector<2x128xf32>
    tpu.vector_store %arg13[%c0_38, %c0_39], %185 {strides = array<i32>} : memref<2x128xf32, #tpu.memory_space<vmem>>, vector<2x128xf32>,
    %c0_i32_40 = arith.constant 0 : i32
    %190 = arith.cmpi eq, %arg1, %c0_i32_40 : i32
    %191 = arith.extui %190 : i1 to i32
    %c0_i32_41 = arith.constant 0 : i32
    %192 = arith.cmpi ne, %191, %c0_i32_41 : i32
    scf.if %192 {
      %c0_42 = arith.constant 0 : index
      %c0_43 = arith.constant 0 : index
      %193 = vector.load %arg9[%c0_42, %c0_43] : memref<128x128xf32, #tpu.memory_space<vmem>>, vector<128x128xf32>
      %cst_44 = arith.constant dense<0.000000e+00> : vector<2x128xf32>
      %194 = tpu.matmul %187, %193, %cst_44 {dimension_numbers = #tpu.dot_dimension_numbers<[1], [0], [0], [1], [0, 0, 1, 1], [], []>} : vector<2x128xf32>, vector<128x128xf32>, vector<2x128xf32> -> vector<2x128xf32>
      %c0_45 = arith.constant 0 : index
      %c0_46 = arith.constant 0 : index
      %195 = vector.load %arg10[%c0_45, %c0_46] : memref<1x128xf32, #tpu.memory_space<vmem>>, vector<1x128xf32>
      %196 = vector.broadcast %195 : vector<1x128xf32> to vector<2x128xf32>
      %197 = arith.addf %194, %196 : vector<2x128xf32>
      %c0_47 = arith.constant 0 : index
      %c0_48 = arith.constant 0 : index
      %198 = vector.load %arg11[%c0_47, %c0_48] : memref<2x128xf32, #tpu.memory_space<vmem>>, vector<2x128xf32>
      tpu.vector_store %arg11[%c0_47, %c0_48], %197 {strides = array<i32>} : memref<2x128xf32, #tpu.memory_space<vmem>>, vector<2x128xf32>,
    } else {
    }
    return
  }
  func.func @transform_0(%arg0: i32, %arg1: i32, %arg2: memref<3xf32, #tpu.memory_space<smem>>) -> (i32, i32, i32) {
    %c0_i32 = arith.constant 0 : i32
    %c0_i32_0 = arith.constant 0 : i32
    return %arg0, %arg1, %c0_i32 : i32, i32, i32
  }
  func.func @transform_1(%arg0: i32, %arg1: i32, %arg2: memref<3xf32, #tpu.memory_space<smem>>) -> (i32, i32, i32) {
    %c0_i32 = arith.constant 0 : i32
    %c0_i32_0 = arith.constant 0 : i32
    return %arg0, %arg1, %c0_i32 : i32, i32, i32
  }
  func.func @transform_2(%arg0: i32, %arg1: i32, %arg2: memref<3xf32, #tpu.memory_space<smem>>) -> (i32, i32, i32) {
    %c0_i32 = arith.constant 0 : i32
    %c0_i32_0 = arith.constant 0 : i32
    return %arg0, %arg1, %c0_i32 : i32, i32, i32
  }
  func.func @transform_3(%arg0: i32, %arg1: i32, %arg2: memref<3xf32, #tpu.memory_space<smem>>) -> (i32, i32) {
    %c0_i32 = arith.constant 0 : i32
    %c0_i32_0 = arith.constant 0 : i32
    %c0_i32_1 = arith.constant 0 : i32
    return %c0_i32, %c0_i32_0 : i32, i32
  }
  func.func @transform_4(%arg0: i32, %arg1: i32, %arg2: memref<3xf32, #tpu.memory_space<smem>>) -> (i32, i32) {
    %c0_i32 = arith.constant 0 : i32
    %c0_i32_0 = arith.constant 0 : i32
    %c0_i32_1 = arith.constant 0 : i32
    return %c0_i32, %c0_i32_0 : i32, i32
  }
  func.func @transform_5(%arg0: i32, %arg1: i32, %arg2: memref<3xf32, #tpu.memory_space<smem>>) -> (i32, i32) {
    %c0_i32 = arith.constant 0 : i32
    %c0_i32_0 = arith.constant 0 : i32
    %c0_i32_1 = arith.constant 0 : i32
    return %c0_i32, %c0_i32_0 : i32, i32
  }
  func.func @transform_6(%arg0: i32, %arg1: i32, %arg2: memref<3xf32, #tpu.memory_space<smem>>) -> (i32, i32) {
    %c0_i32 = arith.constant 0 : i32
    %c0_i32_0 = arith.constant 0 : i32
    %c0_i32_1 = arith.constant 0 : i32
    return %c0_i32, %c0_i32_0 : i32, i32
  }
  func.func @transform_7(%arg0: i32, %arg1: i32, %arg2: memref<3xf32, #tpu.memory_space<smem>>) -> (i32, i32) {
    %c0_i32 = arith.constant 0 : i32
    %c0_i32_0 = arith.constant 0 : i32
    %c0_i32_1 = arith.constant 0 : i32
    return %c0_i32, %c0_i32_0 : i32, i32
  }
  func.func @transform_8(%arg0: i32, %arg1: i32, %arg2: memref<3xf32, #tpu.memory_space<smem>>) -> (i32, i32) {
    %c0_i32 = arith.constant 0 : i32
    %c0_i32_0 = arith.constant 0 : i32
    return %arg0, %c0_i32 : i32, i32
  }
}

</mosaic_0001>

<llo_original>
// kernel: lstm_model_forward.1
$region0: #{lstm_model_forward.1}
  #allocation0 [shape = 'u32[]', space=smem, size = 0x4, offset = 0x4, fixed_abs, tag = 'smem constant byte address 0x4 - core index']
  #allocation1 [shape = 'u32[144,128]{1,0:T(1,128)}', space=vmem, size = 0x12000, scoped, tag = 'internal scratch']
  #allocation2 [shape = 'f32[2,128]{1,0:T(2,128)}', space=vmem, size = 0x400, scoped, tag = 'scratch operand']
  #allocation3 [shape = 'f32[2,128]{1,0:T(2,128)}', space=vmem, size = 0x400, scoped, tag = 'scratch operand']
  #allocation4 [shape = 's32[1]{0}', space=sflag, size = 0x4, scoped, tag = 'scoped memory for lstm_model_forward.1']
  #allocation5 [shape = 'u8[512]{0}', space=smem, size = 0x200, scoped, tag = 'prefetched SMEM operand 0']
  %s0 = inlined_call_operand.vmem [shape: f32[3], index: 0, kind: input, shape index: {}]
  %s1 = inlined_call_operand.vmem [shape: f32[2,8,200], index: 1, kind: input, shape index: {}]
  %s2 = inlined_call_operand.vmem [shape: f32[2,8,200], index: 2, kind: input, shape index: {}]
  %s3 = inlined_call_operand.vmem [shape: f32[2,8,200], index: 3, kind: input, shape index: {}]
  %s4 = inlined_call_operand.vmem [shape: bf16[200,512], index: 4, kind: input, shape index: {}]
  %s5 = inlined_call_operand.vmem [shape: f32[128,512], index: 5, kind: input, shape index: {}]
  %s6 = inlined_call_operand.vmem [shape: f32[1,512], index: 6, kind: input, shape index: {}]
  %s7 = inlined_call_operand.vmem [shape: f32[128,128], index: 7, kind: input, shape index: {}]
  %s8 = inlined_call_operand.vmem [shape: f32[1,128], index: 8, kind: input, shape index: {}]
  %s9 = inlined_call_operand.hbm [shape: f32[2,128], index: 9, kind: output, shape index: {}]
  %s10 = sld [smem:[#allocation0]]
  $region50: #{lstm_model_forward.1} parent=0
    _
  %s12 = ssub.s32 1, %s10
  %s13 = scalar_select 0, %s12, %s10
  %s14 = sshll.u32 %s0, 4
  %s15 = int_to_ptr.vmem [resolvable:$true] %s14
  %17 = dma.vmem_to_smem %s15, 16, [#allocation5], [#allocation4]
  %18 = dma.done [#allocation4], 16
  %19 = sfence
  $region1: #{lstm_model_forward.1} parent=0
    #allocation6 [shape = 'u8[1024]{0}', space=vmem, size = 0x400, scoped, tag = 'output window, operand 0, single buffered']
    #allocation7 [shape = 's32[1]{0}', space=sflag, size = 0x4, scoped, tag = 'scoped memory for lstm_model_forward.1']
    %20 = vsyncpa [#allocation7], 0
    // Predicated region
    $region2: #{lstm_model_forward.1} parent=1 // pred_check
      _
    $region3: #{lstm_model_forward.1} parent=1 // pred_check_branch
      %22 = sbr.rel (0) target = $region5
    $region4: #{lstm_model_forward.1} parent=1 // pred_region
      _
    $region5: #{lstm_model_forward.1} parent=1 // pred_fallthru
      _
    // Predicated region
    $region6: #{lstm_model_forward.1} parent=1 // pred_check
      _
    $region7: #{lstm_model_forward.1} parent=1 // pred_check_branch
      %24 = sbr.rel (0) target = $region9
    $region8: #{lstm_model_forward.1} parent=1 // pred_region
      _
    $region9: #{lstm_model_forward.1} parent=1 // pred_fallthru
      _
    // Predicated region
    $region10: #{lstm_model_forward.1} parent=1 // pred_check
      _
    $region11: #{lstm_model_forward.1} parent=1 // pred_check_branch
      %26 = sbr.rel (0) target = $region13
    $region12: #{lstm_model_forward.1} parent=1 // pred_region
      _
    $region13: #{lstm_model_forward.1} parent=1 // pred_fallthru
      _
    // Predicated region
    $region14: #{lstm_model_forward.1} parent=1 // pred_check
      _
    $region15: #{lstm_model_forward.1} parent=1 // pred_check_branch
      %28 = sbr.rel (0) target = $region17
    $region16: #{lstm_model_forward.1} parent=1 // pred_region
      _
    $region17: #{lstm_model_forward.1} parent=1 // pred_fallthru
      _
    // Predicated region
    $region18: #{lstm_model_forward.1} parent=1 // pred_check
      _
    $region19: #{lstm_model_forward.1} parent=1 // pred_check_branch
      %30 = sbr.rel (0) target = $region21
    $region20: #{lstm_model_forward.1} parent=1 // pred_region
      _
    $region21: #{lstm_model_forward.1} parent=1 // pred_fallthru
      _
    // Predicated region
    $region22: #{lstm_model_forward.1} parent=1 // pred_check
      _
    $region23: #{lstm_model_forward.1} parent=1 // pred_check_branch
      %32 = sbr.rel (0) target = $region25
    $region24: #{lstm_model_forward.1} parent=1 // pred_region
      _
    $region25: #{lstm_model_forward.1} parent=1 // pred_fallthru
      _
    // Predicated region
    $region26: #{lstm_model_forward.1} parent=1 // pred_check
      _
    $region27: #{lstm_model_forward.1} parent=1 // pred_check_branch
      %34 = sbr.rel (0) target = $region29
    $region28: #{lstm_model_forward.1} parent=1 // pred_region
      _
    $region29: #{lstm_model_forward.1} parent=1 // pred_fallthru
      _
    // Predicated region
    $region30: #{lstm_model_forward.1} parent=1 // pred_check
      _
    $region31: #{lstm_model_forward.1} parent=1 // pred_check_branch
      %36 = sbr.rel (0) target = $region33
    $region32: #{lstm_model_forward.1} parent=1 // pred_region
      _
    $region33: #{lstm_model_forward.1} parent=1 // pred_fallthru
      _
    %p38 = scmp.eq.s32.totalorder 0, 0
    // Predicated region
    $region34: #{lstm_model_forward.1} parent=1 // pred_check
      %p39 = pneg %p38
    $region35: #{lstm_model_forward.1} parent=1 // pred_check_branch
      %41 = sbr.rel (%p39) target = $region37
    $region36: #{lstm_model_forward.1} parent=1 // pred_region
      %42 = vst [vmem:[#allocation2] sm:$0x3] 0.0
      %43 = vst [vmem:[#allocation3] sm:$0x3] 0.0
    $region37: #{lstm_model_forward.1} parent=1 // pred_fallthru
      _
    %s44 = sld [smem:[#allocation5]]
    %s45 = sld [smem:[#allocation5 + $0x1]]
    %s46 = sld [smem:[#allocation5 + $0x2]]
    %v47 = vld [vmem:[%s1] sm:$0xff]
    %v48 = vld [vmem:[%s1 + $0x8] sm:$0xff]
    %v49 = vld [vmem:[%s1 + $0x10] sm:$0xff]
    %v50 = vld [vmem:[%s1 + $0x18] sm:$0xff]
    %v51 = vstv %s44
    %v52 = vmul.f32 %v51, %v47
    %v53 = vmul.f32 %v51, %v48
    %v54 = vmul.f32 %v51, %v49
    %v55 = vmul.f32 %v51, %v50
    %v56 = vld [vmem:[%s2] sm:$0xff]
    %v57 = vld [vmem:[%s2 + $0x8] sm:$0xff]
    %v58 = vld [vmem:[%s2 + $0x10] sm:$0xff]
    %v59 = vld [vmem:[%s2 + $0x18] sm:$0xff]
    %v60 = vstv %s45
    %v61 = vmul.f32 %v60, %v56
    %v62 = vmul.f32 %v60, %v57
    %v63 = vmul.f32 %v60, %v58
    %v64 = vmul.f32 %v60, %v59
    %v65 = vadd.f32 %v52, %v61
    %v66 = vadd.f32 %v53, %v62
    %v67 = vadd.f32 %v54, %v63
    %v68 = vadd.f32 %v55, %v64
    %v69 = vld [vmem:[%s3] sm:$0xff]
    %v70 = vld [vmem:[%s3 + $0x8] sm:$0xff]
    %v71 = vld [vmem:[%s3 + $0x10] sm:$0xff]
    %v72 = vld [vmem:[%s3 + $0x18] sm:$0xff]
    %v73 = vstv %s46
    %v74 = vmul.f32 %v73, %v69
    %v75 = vmul.f32 %v73, %v70
    %v76 = vmul.f32 %v73, %v71
    %v77 = vmul.f32 %v73, %v72
    %v78 = vadd.f32 %v65, %v74
    %v79 = vadd.f32 %v66, %v75
    %v80 = vadd.f32 %v67, %v76
    %v81 = vadd.f32 %v68, %v77
    %v82 = vpack.c.bf16 %v80, %v78
    %v83 = vpack.c.bf16 %v81, %v79
    %v84 = vld [vmem:[%s4] sm:$0xff]
    %v85 = vld [vmem:[%s4 + $0x8] sm:$0xff]
    %v86 = vld [vmem:[%s4 + $0x10] sm:$0xff]
    %v87 = vld [vmem:[%s4 + $0x18] sm:$0xff]
    %v88 = vld [vmem:[%s4 + $0x20] sm:$0xff]
    %v89 = vld [vmem:[%s4 + $0x28] sm:$0xff]
    %v90 = vld [vmem:[%s4 + $0x30] sm:$0xff]
    %v91 = vld [vmem:[%s4 + $0x38] sm:$0xff]
    %v92 = vld [vmem:[%s4 + $0x40] sm:$0xff]
    %v93 = vld [vmem:[%s4 + $0x48] sm:$0xff]
    %v94 = vld [vmem:[%s4 + $0x50] sm:$0xff]
    %v95 = vld [vmem:[%s4 + $0x58] sm:$0xff]
    %v96 = vld [vmem:[%s4 + $0x60] sm:$0xff]
    %v97 = vld [vmem:[%s4 + $0x68] sm:$0xff]
    %v98 = vld [vmem:[%s4 + $0x70] sm:$0xff]
    %v99 = vld [vmem:[%s4 + $0x78] sm:$0xff]
    %v100 = vld [vmem:[%s4 + $0x80] sm:$0xff]
    %v101 = vld [vmem:[%s4 + $0x88] sm:$0xff]
    %v102 = vld [vmem:[%s4 + $0x90] sm:$0xff]
    %v103 = vld [vmem:[%s4 + $0x98] sm:$0xff]
    %v104 = vld [vmem:[%s4 + $0xa0] sm:$0xff]
    %v105 = vld [vmem:[%s4 + $0xa8] sm:$0xff]
    %v106 = vld [vmem:[%s4 + $0xb0] sm:$0xff]
    %v107 = vld [vmem:[%s4 + $0xb8] sm:$0xff]
    %v108 = vld [vmem:[%s4 + $0xc0] sm:$0xff]
    %v109 = vld [vmem:[%s4 + $0xc8] sm:$0xff]
    %v110 = vld [vmem:[%s4 + $0xd0] sm:$0xff]
    %v111 = vld [vmem:[%s4 + $0xd8] sm:$0xff]
    %v112 = vld [vmem:[%s4 + $0xe0] sm:$0xff]
    %v113 = vld [vmem:[%s4 + $0xe8] sm:$0xff]
    %v114 = vld [vmem:[%s4 + $0xf0] sm:$0xff]
    %v115 = vld [vmem:[%s4 + $0xf8] sm:$0xff]
    %v116 = vld [vmem:[%s4 + $0x100] sm:$0xff]
    %v117 = vld [vmem:[%s4 + $0x108] sm:$0xff]
    %v118 = vld [vmem:[%s4 + $0x110] sm:$0xff]
    %v119 = vld [vmem:[%s4 + $0x118] sm:$0xff]
    %v120 = vld [vmem:[%s4 + $0x120] sm:$0xff]
    %v121 = vld [vmem:[%s4 + $0x128] sm:$0xff]
    %v122 = vld [vmem:[%s4 + $0x130] sm:$0xff]
    %v123 = vld [vmem:[%s4 + $0x138] sm:$0xff]
    %v124 = vld [vmem:[%s4 + $0x140] sm:$0xff]
    %v125 = vld [vmem:[%s4 + $0x148] sm:$0xff]
    %v126 = vld [vmem:[%s4 + $0x150] sm:$0xff]
    %v127 = vld [vmem:[%s4 + $0x158] sm:$0xff]
    %v128 = vld [vmem:[%s4 + $0x160] sm:$0xff]
    %v129 = vld [vmem:[%s4 + $0x168] sm:$0xff]
    %v130 = vld [vmem:[%s4 + $0x170] sm:$0xff]
    %v131 = vld [vmem:[%s4 + $0x178] sm:$0xff]
    %v132 = vld [vmem:[%s4 + $0x180] sm:$0xff]
    %v133 = vld [vmem:[%s4 + $0x188] sm:$0xff]
    %v134 = vld [vmem:[%s6] sm:$0xf]
    %v136 = vlaneseq
    %v137 = vshrl.u32 %v136, 7
    %v138 = vsub.s32 0, %v137
    %v139 = vrot.slane %v134, %v138
    %v140 = vlaneseq
    %v141 = vshrl.u32 %v140, 7
    %v142 = vsub.s32 1, %v141
    %v143 = vrot.slane %v134, %v142
    %v144 = vlaneseq
    %v145 = vshrl.u32 %v144, 7
    %v146 = vsub.s32 2, %v145
    %v147 = vrot.slane %v134, %v146
    %v148 = vlaneseq
    %v149 = vshrl.u32 %v148, 7
    %v150 = vsub.s32 3, %v149
    %v151 = vrot.slane %v134, %v150
    %v206 = vunpack.c.l.b16 %v84
    %v207 = vunpack.c.h.b16 %v84
    %v208 = vunpack.c.l.b16 %v85
    %v209 = vunpack.c.h.b16 %v85
    %v210 = vunpack.c.l.b16 %v86
    %v211 = vunpack.c.h.b16 %v86
    %v212 = vunpack.c.l.b16 %v87
    %v213 = vunpack.c.h.b16 %v87
    %v214 = vunpack.c.l.b16 %v88
    %v215 = vunpack.c.h.b16 %v88
    %v216 = vunpack.c.l.b16 %v89
    %v217 = vunpack.c.h.b16 %v89
    %v218 = vunpack.c.l.b16 %v90
    %v219 = vunpack.c.h.b16 %v90
    %v220 = vunpack.c.l.b16 %v91
    %v221 = vunpack.c.h.b16 %v91
    %v222 = vunpack.c.l.b16 %v92
    %v223 = vunpack.c.h.b16 %v92
    %v224 = vunpack.c.l.b16 %v93
    %v225 = vunpack.c.h.b16 %v93
    %v226 = vunpack.c.l.b16 %v94
    %v227 = vunpack.c.h.b16 %v94
    %v228 = vunpack.c.l.b16 %v95
    %v229 = vunpack.c.h.b16 %v95
    %v230 = vunpack.c.l.b16 %v96
    %v231 = vunpack.c.h.b16 %v96
    %v232 = vunpack.c.l.b16 %v97
    %v233 = vunpack.c.h.b16 %v97
    %v234 = vunpack.c.l.b16 %v98
    %v235 = vunpack.c.h.b16 %v98
    %v236 = vunpack.c.l.b16 %v99
    %v237 = vunpack.c.h.b16 %v99
    %v238 = vunpack.c.l.b16 %v100
    %v239 = vunpack.c.h.b16 %v100
    %v240 = vunpack.c.l.b16 %v101
    %v241 = vunpack.c.h.b16 %v101
    %v242 = vunpack.c.l.b16 %v102
    %v243 = vunpack.c.h.b16 %v102
    %v244 = vunpack.c.l.b16 %v103
    %v245 = vunpack.c.h.b16 %v103
    %v246 = vunpack.c.l.b16 %v104
    %v247 = vunpack.c.h.b16 %v104
    %v248 = vunpack.c.l.b16 %v105
    %v249 = vunpack.c.h.b16 %v105
    %v250 = vunpack.c.l.b16 %v106
    %v251 = vunpack.c.h.b16 %v106
    %v252 = vunpack.c.l.b16 %v107
    %v253 = vunpack.c.h.b16 %v107
    %v254 = vunpack.c.l.b16 %v108
    %v255 = vunpack.c.h.b16 %v108
    %v256 = vunpack.c.l.b16 %v109
    %v257 = vunpack.c.h.b16 %v109
    %v258 = vunpack.c.l.b16 %v110
    %v259 = vunpack.c.h.b16 %v110
    %v260 = vunpack.c.l.b16 %v111
    %v261 = vunpack.c.h.b16 %v111
    %v262 = vunpack.c.l.b16 %v112
    %v263 = vunpack.c.h.b16 %v112
    %v264 = vunpack.c.l.b16 %v113
    %v265 = vunpack.c.h.b16 %v113
    %v266 = vunpack.c.l.b16 %v114
    %v267 = vunpack.c.h.b16 %v114
    %v268 = vunpack.c.l.b16 %v115
    %v269 = vunpack.c.h.b16 %v115
    %v270 = vunpack.c.l.b16 %v116
    %v271 = vunpack.c.h.b16 %v116
    %v272 = vunpack.c.l.b16 %v117
    %v273 = vunpack.c.h.b16 %v117
    %v274 = vunpack.c.l.b16 %v118
    %v275 = vunpack.c.h.b16 %v118
    %v276 = vunpack.c.l.b16 %v119
    %v277 = vunpack.c.h.b16 %v119
    %v278 = vunpack.c.l.b16 %v120
    %v279 = vunpack.c.h.b16 %v120
    %v280 = vunpack.c.l.b16 %v121
    %v281 = vunpack.c.h.b16 %v121
    %v282 = vunpack.c.l.b16 %v122
    %v283 = vunpack.c.h.b16 %v122
    %v284 = vunpack.c.l.b16 %v123
    %v285 = vunpack.c.h.b16 %v123
    %v286 = vunpack.c.l.b16 %v124
    %v287 = vunpack.c.h.b16 %v124
    %v288 = vunpack.c.l.b16 %v125
    %v289 = vunpack.c.h.b16 %v125
    %v290 = vunpack.c.l.b16 %v126
    %v291 = vunpack.c.h.b16 %v126
    %v292 = vunpack.c.l.b16 %v127
    %v293 = vunpack.c.h.b16 %v127
    %v294 = vunpack.c.l.b16 %v128
    %v295 = vunpack.c.h.b16 %v128
    %v296 = vunpack.c.l.b16 %v129
    %v297 = vunpack.c.h.b16 %v129
    %v298 = vunpack.c.l.b16 %v130
    %v299 = vunpack.c.h.b16 %v130
    %v300 = vunpack.c.l.b16 %v131
    %v301 = vunpack.c.h.b16 %v131
    %v302 = vunpack.c.l.b16 %v132
    %v303 = vunpack.c.h.b16 %v132
    %v304 = vunpack.c.l.b16 %v133
    %v305 = vunpack.c.h.b16 %v133
    %v306 = vpack.c.b16 %v210, %v206
    %v307 = vpack.c.b16 %v211, %v207
    %v308 = vpack.c.b16 %v212, %v208
    %v309 = vpack.c.b16 %v213, %v209
    %v310 = vpack.c.b16 %v218, %v214
    %v311 = vpack.c.b16 %v219, %v215
    %v312 = vpack.c.b16 %v220, %v216
    %v313 = vpack.c.b16 %v221, %v217
    %v314 = vpack.c.b16 %v226, %v222
    %v315 = vpack.c.b16 %v227, %v223
    %v316 = vpack.c.b16 %v228, %v224
    %v317 = vpack.c.b16 %v229, %v225
    %v318 = vpack.c.b16 %v234, %v230
    %v319 = vpack.c.b16 %v235, %v231
    %v320 = vpack.c.b16 %v236, %v232
    %v321 = vpack.c.b16 %v237, %v233
    %v322 = vpack.c.b16 %v242, %v238
    %v323 = vpack.c.b16 %v243, %v239
    %v324 = vpack.c.b16 %v244, %v240
    %v325 = vpack.c.b16 %v245, %v241
    %v326 = vpack.c.b16 %v250, %v246
    %v327 = vpack.c.b16 %v251, %v247
    %v328 = vpack.c.b16 %v252, %v248
    %v329 = vpack.c.b16 %v253, %v249
    %v330 = vpack.c.b16 %v258, %v254
    %v331 = vpack.c.b16 %v259, %v255
    %v332 = vpack.c.b16 %v260, %v256
    %v333 = vpack.c.b16 %v261, %v257
    %v334 = vpack.c.b16 %v266, %v262
    %v335 = vpack.c.b16 %v267, %v263
    %v336 = vpack.c.b16 %v268, %v264
    %v337 = vpack.c.b16 %v269, %v265
    %v338 = vpack.c.b16 %v274, %v270
    %v339 = vpack.c.b16 %v275, %v271
    %v340 = vpack.c.b16 %v276, %v272
    %v341 = vpack.c.b16 %v277, %v273
    %v342 = vpack.c.b16 %v282, %v278
    %v343 = vpack.c.b16 %v283, %v279
    %v344 = vpack.c.b16 %v284, %v280
    %v345 = vpack.c.b16 %v285, %v281
    %v346 = vpack.c.b16 %v290, %v286
    %v347 = vpack.c.b16 %v291, %v287
    %v348 = vpack.c.b16 %v292, %v288
    %v349 = vpack.c.b16 %v293, %v289
    %v350 = vpack.c.b16 %v298, %v294
    %v351 = vpack.c.b16 %v299, %v295
    %v352 = vpack.c.b16 %v300, %v296
    %v353 = vpack.c.b16 %v301, %v297
    %v354 = vpack.c.b16 %v302, %v302
    %v355 = vpack.c.b16 %v303, %v303
    %v356 = vpack.c.b16 %v304, %v304
    %v357 = vpack.c.b16 %v305, %v305
    %vm406 = vcmask 588800
    %v408 = vsel %vm406, %v83, 0
    %vm410 = vcmask 1043456
    %v412 = vsel %vm410, %v354, 0
    %v415 = vsel %vm410, %v355, 0
    %v418 = vsel %vm410, %v356, 0
    %v421 = vsel %vm410, %v357, 0
    %423 = vmatprep.subr.bf16.mxu0 %v335
    %424 = vmatpush1.bf16.msra.mxu0 %v334
    %425 = vmatprep.subr.bf16.mxu0 %v331
    %426 = vmatpush1.bf16.msra.mxu0 %v330
    %427 = vmatprep.subr.bf16.mxu0 %v327
    %428 = vmatpush1.bf16.msra.mxu0 %v326
    %429 = vmatprep.subr.bf16.mxu0 %v323
    %430 = vmatpush1.bf16.msra.mxu0 %v322
    %431 = vmatprep.subr.bf16.mxu0 %v319
    %432 = vmatpush1.bf16.msra.mxu0 %v318
    %433 = vmatprep.subr.bf16.mxu0 %v315
    %434 = vmatpush1.bf16.msra.mxu0 %v314
    %435 = vmatprep.subr.bf16.mxu0 %v311
    %436 = vmatpush1.bf16.msra.mxu0 %v310
    %437 = vmatprep.subr.bf16.mxu0 %v307
    %438 = vmatpush1.bf16.msra.mxu0 %v306
    %439 = vmatprep.subr.bf16.mxu0 0
    %440 = vmatpush2.bf16.msra.mxu0 0
    %441 = vmatprep.subr.bf16.mxu0 0
    %442 = vmatpush2.bf16.msra.mxu0 0
    %443 = vmatprep.subr.bf16.mxu0 0
    %444 = vmatpush2.bf16.msra.mxu0 0
    %445 = vmatprep.subr.bf16.mxu0 %v415
    %446 = vmatpush2.bf16.msra.mxu0 %v412
    %447 = vmatprep.subr.bf16.mxu0 %v351
    %448 = vmatpush2.bf16.msra.mxu0 %v350
    %449 = vmatprep.subr.bf16.mxu0 %v347
    %450 = vmatpush2.bf16.msra.mxu0 %v346
    %451 = vmatprep.subr.bf16.mxu0 %v343
    %452 = vmatpush2.bf16.msra.mxu0 %v342
    %453 = vmatprep.subr.bf16.mxu0 %v339
    %454 = vmatpush2.bf16.msra.mxu0 %v338
    %455 = vmatprep.mubr.bf16.mxu0 %v408
    %456 = vmatmul.mubr.bf16.gmra.mxu0 %v82
    %v457 = vpop.f32.mrf.mxu0
    %v458 = vadd.f32 %v139, %v457
    %v459 = vpop.f32.mrf.mxu0
    %v460 = vadd.f32 %v143, %v459
    %v461 = vpop.f32.mrf.mxu0
    %v462 = vadd.f32 %v139, %v461
    %v463 = vpop.f32.mrf.mxu0
    %v464 = vadd.f32 %v143, %v463
    %465 = vdwg.mxu0
    %466 = vmatprep.subr.bf16.mxu0 %v337
    %467 = vmatpush1.bf16.msra.mxu0 %v336
    %468 = vmatprep.subr.bf16.mxu0 %v333
    %469 = vmatpush1.bf16.msra.mxu0 %v332
    %470 = vmatprep.subr.bf16.mxu0 %v329
    %471 = vmatpush1.bf16.msra.mxu0 %v328
    %472 = vmatprep.subr.bf16.mxu0 %v325
    %473 = vmatpush1.bf16.msra.mxu0 %v324
    %474 = vmatprep.subr.bf16.mxu0 %v321
    %475 = vmatpush1.bf16.msra.mxu0 %v320
    %476 = vmatprep.subr.bf16.mxu0 %v317
    %477 = vmatpush1.bf16.msra.mxu0 %v316
    %478 = vmatprep.subr.bf16.mxu0 %v313
    %479 = vmatpush1.bf16.msra.mxu0 %v312
    %480 = vmatprep.subr.bf16.mxu0 %v309
    %481 = vmatpush1.bf16.msra.mxu0 %v308
    %482 = vmatprep.subr.bf16.mxu0 0
    %483 = vmatpush2.bf16.msra.mxu0 0
    %484 = vmatprep.subr.bf16.mxu0 0
    %485 = vmatpush2.bf16.msra.mxu0 0
    %486 = vmatprep.subr.bf16.mxu0 0
    %487 = vmatpush2.bf16.msra.mxu0 0
    %488 = vmatprep.subr.bf16.mxu0 %v421
    %489 = vmatpush2.bf16.msra.mxu0 %v418
    %490 = vmatprep.subr.bf16.mxu0 %v353
    %491 = vmatpush2.bf16.msra.mxu0 %v352
    %492 = vmatprep.subr.bf16.mxu0 %v349
    %493 = vmatpush2.bf16.msra.mxu0 %v348
    %494 = vmatprep.subr.bf16.mxu0 %v345
    %495 = vmatpush2.bf16.msra.mxu0 %v344
    %496 = vmatprep.subr.bf16.mxu0 %v341
    %497 = vmatpush2.bf16.msra.mxu0 %v340
    %498 = vmatprep.mubr.bf16.mxu0 %v408
    %499 = vmatmul.mubr.bf16.gmra.mxu0 %v82
    %v500 = vpop.f32.mrf.mxu0
    %v501 = vadd.f32 %v147, %v500
    %v502 = vpop.f32.mrf.mxu0
    %v503 = vadd.f32 %v151, %v502
    %v504 = vpop.f32.mrf.mxu0
    %v505 = vadd.f32 %v147, %v504
    %v506 = vpop.f32.mrf.mxu0
    %v507 = vadd.f32 %v151, %v506
    %508 = vdwg.mxu0
    %v509 = vld [vmem:[%s5] sm:$0xff]
    %v510 = vld [vmem:[%s5 + $0x8] sm:$0xff]
    %v511 = vld [vmem:[%s5 + $0x10] sm:$0xff]
    %v512 = vld [vmem:[%s5 + $0x18] sm:$0xff]
    %v513 = vld [vmem:[%s5 + $0x20] sm:$0xff]
    %v514 = vld [vmem:[%s5 + $0x28] sm:$0xff]
    %v515 = vld [vmem:[%s5 + $0x30] sm:$0xff]
    %v516 = vld [vmem:[%s5 + $0x38] sm:$0xff]
    %v517 = vld [vmem:[%s5 + $0x40] sm:$0xff]
    %v518 = vld [vmem:[%s5 + $0x48] sm:$0xff]
    %v519 = vld [vmem:[%s5 + $0x50] sm:$0xff]
    %v520 = vld [vmem:[%s5 + $0x58] sm:$0xff]
    %v521 = vld [vmem:[%s5 + $0x60] sm:$0xff]
    %v522 = vld [vmem:[%s5 + $0x68] sm:$0xff]
    %v523 = vld [vmem:[%s5 + $0x70] sm:$0xff]
    %v524 = vld [vmem:[%s5 + $0x78] sm:$0xff]
    %v525 = vld [vmem:[%s5 + $0x80] sm:$0xff]
    %v526 = vld [vmem:[%s5 + $0x88] sm:$0xff]
    %v527 = vld [vmem:[%s5 + $0x90] sm:$0xff]
    %v528 = vld [vmem:[%s5 + $0x98] sm:$0xff]
    %v529 = vld [vmem:[%s5 + $0xa0] sm:$0xff]
    %v530 = vld [vmem:[%s5 + $0xa8] sm:$0xff]
    %v531 = vld [vmem:[%s5 + $0xb0] sm:$0xff]
    %v532 = vld [vmem:[%s5 + $0xb8] sm:$0xff]
    %v533 = vld [vmem:[%s5 + $0xc0] sm:$0xff]
    %v534 = vld [vmem:[%s5 + $0xc8] sm:$0xff]
    %v535 = vld [vmem:[%s5 + $0xd0] sm:$0xff]
    %v536 = vld [vmem:[%s5 + $0xd8] sm:$0xff]
    %v537 = vld [vmem:[%s5 + $0xe0] sm:$0xff]
    %v538 = vld [vmem:[%s5 + $0xe8] sm:$0xff]
    %v539 = vld [vmem:[%s5 + $0xf0] sm:$0xff]
    %v540 = vld [vmem:[%s5 + $0xf8] sm:$0xff]
    %v541 = vld [vmem:[%s5 + $0x100] sm:$0xff]
    %v542 = vld [vmem:[%s5 + $0x108] sm:$0xff]
    %v543 = vld [vmem:[%s5 + $0x110] sm:$0xff]
    %v544 = vld [vmem:[%s5 + $0x118] sm:$0xff]
    %v545 = vld [vmem:[%s5 + $0x120] sm:$0xff]
    %v546 = vld [vmem:[%s5 + $0x128] sm:$0xff]
    %v547 = vld [vmem:[%s5 + $0x130] sm:$0xff]
    %v548 = vld [vmem:[%s5 + $0x138] sm:$0xff]
    %v549 = vld [vmem:[%s5 + $0x140] sm:$0xff]
    %v550 = vld [vmem:[%s5 + $0x148] sm:$0xff]
    %v551 = vld [vmem:[%s5 + $0x150] sm:$0xff]
    %v552 = vld [vmem:[%s5 + $0x158] sm:$0xff]
    %v553 = vld [vmem:[%s5 + $0x160] sm:$0xff]
    %v554 = vld [vmem:[%s5 + $0x168] sm:$0xff]
    %v555 = vld [vmem:[%s5 + $0x170] sm:$0xff]
    %v556 = vld [vmem:[%s5 + $0x178] sm:$0xff]
    %v557 = vld [vmem:[%s5 + $0x180] sm:$0xff]
    %v558 = vld [vmem:[%s5 + $0x188] sm:$0xff]
    %v559 = vld [vmem:[%s5 + $0x190] sm:$0xff]
    %v560 = vld [vmem:[%s5 + $0x198] sm:$0xff]
    %v561 = vld [vmem:[%s5 + $0x1a0] sm:$0xff]
    %v562 = vld [vmem:[%s5 + $0x1a8] sm:$0xff]
    %v563 = vld [vmem:[%s5 + $0x1b0] sm:$0xff]
    %v564 = vld [vmem:[%s5 + $0x1b8] sm:$0xff]
    %v565 = vld [vmem:[%s5 + $0x1c0] sm:$0xff]
    %v566 = vld [vmem:[%s5 + $0x1c8] sm:$0xff]
    %v567 = vld [vmem:[%s5 + $0x1d0] sm:$0xff]
    %v568 = vld [vmem:[%s5 + $0x1d8] sm:$0xff]
    %v569 = vld [vmem:[%s5 + $0x1e0] sm:$0xff]
    %v570 = vld [vmem:[%s5 + $0x1e8] sm:$0xff]
    %v571 = vld [vmem:[%s5 + $0x1f0] sm:$0xff]
    %v572 = vld [vmem:[%s5 + $0x1f8] sm:$0xff]
    %v573 = vld [vmem:[#allocation2] sm:$0x3]
    %v574 = vld [vmem:[#allocation3] sm:$0x3]
    %575 = vmatprep.subr.mxu0 %v570
    %576 = vmatpush1.msra.mxu0 %v569
    %577 = vmatprep.subr.mxu0 %v566
    %578 = vmatpush1.msra.mxu0 %v565
    %579 = vmatprep.subr.mxu0 %v562
    %580 = vmatpush1.msra.mxu0 %v561
    %581 = vmatprep.subr.mxu0 %v558
    %582 = vmatpush1.msra.mxu0 %v557
    %583 = vmatprep.subr.mxu0 %v554
    %584 = vmatpush1.msra.mxu0 %v553
    %585 = vmatprep.subr.mxu0 %v550
    %586 = vmatpush1.msra.mxu0 %v549
    %587 = vmatprep.subr.mxu0 %v546
    %588 = vmatpush1.msra.mxu0 %v545
    %589 = vmatprep.subr.mxu0 %v542
    %590 = vmatpush1.msra.mxu0 %v541
    %591 = vmatprep.subr.mxu0 %v538
    %592 = vmatpush1.msra.mxu0 %v537
    %593 = vmatprep.subr.mxu0 %v534
    %594 = vmatpush1.msra.mxu0 %v533
    %595 = vmatprep.subr.mxu0 %v530
    %596 = vmatpush1.msra.mxu0 %v529
    %597 = vmatprep.subr.mxu0 %v526
    %598 = vmatpush1.msra.mxu0 %v525
    %599 = vmatprep.subr.mxu0 %v522
    %600 = vmatpush1.msra.mxu0 %v521
    %601 = vmatprep.subr.mxu0 %v518
    %602 = vmatpush1.msra.mxu0 %v517
    %603 = vmatprep.subr.mxu0 %v514
    %604 = vmatpush1.msra.mxu0 %v513
    %605 = vmatprep.subr.mxu0 %v510
    %606 = vmatpush1.msra.mxu0 %v509
    %607 = vmatprep.subr.mxu0 0.0
    %608 = vmatpush2.msra.mxu0 0.0
    %609 = vmatprep.subr.mxu0 0.0
    %610 = vmatpush2.msra.mxu0 0.0
    %611 = vmatprep.subr.mxu0 0.0
    %612 = vmatpush2.msra.mxu0 0.0
    %613 = vmatprep.subr.mxu0 0.0
    %614 = vmatpush2.msra.mxu0 0.0
    %615 = vmatprep.subr.mxu0 0.0
    %616 = vmatpush2.msra.mxu0 0.0
    %617 = vmatprep.subr.mxu0 0.0
    %618 = vmatpush2.msra.mxu0 0.0
    %619 = vmatprep.subr.mxu0 0.0
    %620 = vmatpush2.msra.mxu0 0.0
    %621 = vmatprep.subr.mxu0 0.0
    %622 = vmatpush2.msra.mxu0 0.0
    %623 = vmatprep.subr.mxu0 0.0
    %624 = vmatpush2.msra.mxu0 0.0
    %625 = vmatprep.subr.mxu0 0.0
    %626 = vmatpush2.msra.mxu0 0.0
    %627 = vmatprep.subr.mxu0 0.0
    %628 = vmatpush2.msra.mxu0 0.0
    %629 = vmatprep.subr.mxu0 0.0
    %630 = vmatpush2.msra.mxu0 0.0
    %631 = vmatprep.subr.mxu0 0.0
    %632 = vmatpush2.msra.mxu0 0.0
    %633 = vmatprep.subr.mxu0 0.0
    %634 = vmatpush2.msra.mxu0 0.0
    %635 = vmatprep.subr.mxu0 0.0
    %636 = vmatpush2.msra.mxu0 0.0
    %637 = vmatprep.subr.mxu0 0.0
    %638 = vmatpush2.msra.mxu0 0.0
    %639 = vmatprep.mubr.f32.mxu0 0.0
    %640 = vmatmul.mubr.f32.gmra.mxu0 %v573
    %v641 = vpop.f32.mrf.mxu0
    %v642 = vadd.f32 0.0, %v641
    %v643 = vpop.f32.mrf.mxu0
    %v644 = vadd.f32 0.0, %v643
    %645 = vdwg.mxu0
    %646 = vmatprep.subr.mxu0 %v572
    %647 = vmatpush1.msra.mxu0 %v571
    %648 = vmatprep.subr.mxu0 %v568
    %649 = vmatpush1.msra.mxu0 %v567
    %650 = vmatprep.subr.mxu0 %v564
    %651 = vmatpush1.msra.mxu0 %v563
    %652 = vmatprep.subr.mxu0 %v560
    %653 = vmatpush1.msra.mxu0 %v559
    %654 = vmatprep.subr.mxu0 %v556
    %655 = vmatpush1.msra.mxu0 %v555
    %656 = vmatprep.subr.mxu0 %v552
    %657 = vmatpush1.msra.mxu0 %v551
    %658 = vmatprep.subr.mxu0 %v548
    %659 = vmatpush1.msra.mxu0 %v547
    %660 = vmatprep.subr.mxu0 %v544
    %661 = vmatpush1.msra.mxu0 %v543
    %662 = vmatprep.subr.mxu0 %v540
    %663 = vmatpush1.msra.mxu0 %v539
    %664 = vmatprep.subr.mxu0 %v536
    %665 = vmatpush1.msra.mxu0 %v535
    %666 = vmatprep.subr.mxu0 %v532
    %667 = vmatpush1.msra.mxu0 %v531
    %668 = vmatprep.subr.mxu0 %v528
    %669 = vmatpush1.msra.mxu0 %v527
    %670 = vmatprep.subr.mxu0 %v524
    %671 = vmatpush1.msra.mxu0 %v523
    %672 = vmatprep.subr.mxu0 %v520
    %673 = vmatpush1.msra.mxu0 %v519
    %674 = vmatprep.subr.mxu0 %v516
    %675 = vmatpush1.msra.mxu0 %v515
    %676 = vmatprep.subr.mxu0 %v512
    %677 = vmatpush1.msra.mxu0 %v511
    %678 = vmatprep.subr.mxu0 0.0
    %679 = vmatpush2.msra.mxu0 0.0
    %680 = vmatprep.subr.mxu0 0.0
    %681 = vmatpush2.msra.mxu0 0.0
    %682 = vmatprep.subr.mxu0 0.0
    %683 = vmatpush2.msra.mxu0 0.0
    %684 = vmatprep.subr.mxu0 0.0
    %685 = vmatpush2.msra.mxu0 0.0
    %686 = vmatprep.subr.mxu0 0.0
    %687 = vmatpush2.msra.mxu0 0.0
    %688 = vmatprep.subr.mxu0 0.0
    %689 = vmatpush2.msra.mxu0 0.0
    %690 = vmatprep.subr.mxu0 0.0
    %691 = vmatpush2.msra.mxu0 0.0
    %692 = vmatprep.subr.mxu0 0.0
    %693 = vmatpush2.msra.mxu0 0.0
    %694 = vmatprep.subr.mxu0 0.0
    %695 = vmatpush2.msra.mxu0 0.0
    %696 = vmatprep.subr.mxu0 0.0
    %697 = vmatpush2.msra.mxu0 0.0
    %698 = vmatprep.subr.mxu0 0.0
    %699 = vmatpush2.msra.mxu0 0.0
    %700 = vmatprep.subr.mxu0 0.0
    %701 = vmatpush2.msra.mxu0 0.0
    %702 = vmatprep.subr.mxu0 0.0
    %703 = vmatpush2.msra.mxu0 0.0
    %704 = vmatprep.subr.mxu0 0.0
    %705 = vmatpush2.msra.mxu0 0.0
    %706 = vmatprep.subr.mxu0 0.0
    %707 = vmatpush2.msra.mxu0 0.0
    %708 = vmatprep.subr.mxu0 0.0
    %709 = vmatpush2.msra.mxu0 0.0
    %710 = vmatprep.mubr.f32.mxu0 0.0
    %711 = vmatmul.mubr.f32.gmra.mxu0 %v573
    %v712 = vpop.f32.mrf.mxu0
    %v713 = vadd.f32 0.0, %v712
    %v714 = vpop.f32.mrf.mxu0
    %v715 = vadd.f32 0.0, %v714
    %716 = vdwg.mxu0
    %v721 = vrot.slane %v642, 1
    %v722 = vrot.slane %v644, 1
    %v723 = vrot.slane %v713, 1
    %v724 = vrot.slane %v715, 1
    %v733 = vadd.f32 %v458, %v642
    %v734 = vadd.f32 %v460, %v644
    %v735 = vadd.f32 %v501, %v713
    %v736 = vadd.f32 %v503, %v715
    %v737 = vadd.f32 %v462, %v721
    %v738 = vadd.f32 %v464, %v722
    %v739 = vadd.f32 %v505, %v723
    %v740 = vadd.f32 %v507, %v724
    %v741 = vxor.u32 %v733, 2147483648
    %v742 = vxor.u32 %v734, 2147483648
    %v743 = vxor.u32 %v735, 2147483648
    %v744 = vxor.u32 %v737, 2147483648
    %v745 = vxor.u32 %v738, 2147483648
    %v746 = vxor.u32 %v739, 2147483648
    %v747 = vmul.f32 %v741, 1.442695
    %v748 = vpow.pop %v747
    %v749 = vmul.f32 %v742, 1.442695
    %v750 = vpow.pop %v749
    %v751 = vmul.f32 %v743, 1.442695
    %v752 = vpow.pop %v751
    %v753 = vmul.f32 %v744, 1.442695
    %v754 = vpow.pop %v753
    %v755 = vmul.f32 %v745, 1.442695
    %v756 = vpow.pop %v755
    %v757 = vmul.f32 %v746, 1.442695
    %v758 = vpow.pop %v757
    %v759 = vadd.f32 %v748, 1.0
    %v760 = vadd.f32 %v750, 1.0
    %v761 = vadd.f32 %v752, 1.0
    %v762 = vadd.f32 %v754, 1.0
    %v763 = vadd.f32 %v756, 1.0
    %v764 = vadd.f32 %v758, 1.0
    %v765 = vrcp.pop %v759
    %v766 = vmul.f32 1.0, %v765
    %v767 = vrcp.pop %v760
    %v768 = vmul.f32 1.0, %v767
    %v769 = vrcp.pop %v761
    %v770 = vmul.f32 1.0, %v769
    %v771 = vrcp.pop %v762
    %v772 = vmul.f32 1.0, %v771
    %v773 = vrcp.pop %v763
    %v774 = vmul.f32 1.0, %v773
    %v775 = vrcp.pop %v764
    %v776 = vmul.f32 1.0, %v775
    %v777 = vtanh.pop %v736
    %v778 = vtanh.pop %v740
    %v780 = vrot.slane %v574, 1
    %v783 = vmul.f32 %v768, %v574
    %v784 = vmul.f32 %v774, %v780
    %v785 = vmul.f32 %v766, %v777
    %v786 = vmul.f32 %v772, %v778
    %v787 = vadd.f32 %v783, %v785
    %v788 = vadd.f32 %v784, %v786
    %v789 = vtanh.pop %v787
    %v790 = vtanh.pop %v788
    %v791 = vmul.f32 %v770, %v789
    %v792 = vmul.f32 %v776, %v790
    %v795 = vrot.slane %v792, 7
    %vm796 = vcmask 1041409
    %v797 = vsel %vm796, %v795, %v791
    %799 = vmatprep.subr.mxu0 %v570
    %800 = vmatpush1.msra.mxu0 %v569
    %801 = vmatprep.subr.mxu0 %v566
    %802 = vmatpush1.msra.mxu0 %v565
    %803 = vmatprep.subr.mxu0 %v562
    %804 = vmatpush1.msra.mxu0 %v561
    %805 = vmatprep.subr.mxu0 %v558
    %806 = vmatpush1.msra.mxu0 %v557
    %807 = vmatprep.subr.mxu0 %v554
    %808 = vmatpush1.msra.mxu0 %v553
    %809 = vmatprep.subr.mxu0 %v550
    %810 = vmatpush1.msra.mxu0 %v549
    %811 = vmatprep.subr.mxu0 %v546
    %812 = vmatpush1.msra.mxu0 %v545
    %813 = vmatprep.subr.mxu0 %v542
    %814 = vmatpush1.msra.mxu0 %v541
    %815 = vmatprep.subr.mxu0 %v538
    %816 = vmatpush1.msra.mxu0 %v537
    %817 = vmatprep.subr.mxu0 %v534
    %818 = vmatpush1.msra.mxu0 %v533
    %819 = vmatprep.subr.mxu0 %v530
    %820 = vmatpush1.msra.mxu0 %v529
    %821 = vmatprep.subr.mxu0 %v526
    %822 = vmatpush1.msra.mxu0 %v525
    %823 = vmatprep.subr.mxu0 %v522
    %824 = vmatpush1.msra.mxu0 %v521
    %825 = vmatprep.subr.mxu0 %v518
    %826 = vmatpush1.msra.mxu0 %v517
    %827 = vmatprep.subr.mxu0 %v514
    %828 = vmatpush1.msra.mxu0 %v513
    %829 = vmatprep.subr.mxu0 %v510
    %830 = vmatpush1.msra.mxu0 %v509
    %831 = vmatprep.subr.mxu0 0.0
    %832 = vmatpush2.msra.mxu0 0.0
    %833 = vmatprep.subr.mxu0 0.0
    %834 = vmatpush2.msra.mxu0 0.0
    %835 = vmatprep.subr.mxu0 0.0
    %836 = vmatpush2.msra.mxu0 0.0
    %837 = vmatprep.subr.mxu0 0.0
    %838 = vmatpush2.msra.mxu0 0.0
    %839 = vmatprep.subr.mxu0 0.0
    %840 = vmatpush2.msra.mxu0 0.0
    %841 = vmatprep.subr.mxu0 0.0
    %842 = vmatpush2.msra.mxu0 0.0
    %843 = vmatprep.subr.mxu0 0.0
    %844 = vmatpush2.msra.mxu0 0.0
    %845 = vmatprep.subr.mxu0 0.0
    %846 = vmatpush2.msra.mxu0 0.0
    %847 = vmatprep.subr.mxu0 0.0
    %848 = vmatpush2.msra.mxu0 0.0
    %849 = vmatprep.subr.mxu0 0.0
    %850 = vmatpush2.msra.mxu0 0.0
    %851 = vmatprep.subr.mxu0 0.0
    %852 = vmatpush2.msra.mxu0 0.0
    %853 = vmatprep.subr.mxu0 0.0
    %854 = vmatpush2.msra.mxu0 0.0
    %855 = vmatprep.subr.mxu0 0.0
    %856 = vmatpush2.msra.mxu0 0.0
    %857 = vmatprep.subr.mxu0 0.0
    %858 = vmatpush2.msra.mxu0 0.0
    %859 = vmatprep.subr.mxu0 0.0
    %860 = vmatpush2.msra.mxu0 0.0
    %861 = vmatprep.subr.mxu0 0.0
    %862 = vmatpush2.msra.mxu0 0.0
    %863 = vmatprep.mubr.f32.mxu0 0.0
    %864 = vmatmul.mubr.f32.gmra.mxu0 %v797
    %v865 = vpop.f32.mrf.mxu0
    %v866 = vadd.f32 0.0, %v865
    %v867 = vpop.f32.mrf.mxu0
    %v868 = vadd.f32 0.0, %v867
    %869 = vdwg.mxu0
    %870 = vmatprep.subr.mxu0 %v572
    %871 = vmatpush1.msra.mxu0 %v571
    %872 = vmatprep.subr.mxu0 %v568
    %873 = vmatpush1.msra.mxu0 %v567
    %874 = vmatprep.subr.mxu0 %v564
    %875 = vmatpush1.msra.mxu0 %v563
    %876 = vmatprep.subr.mxu0 %v560
    %877 = vmatpush1.msra.mxu0 %v559
    %878 = vmatprep.subr.mxu0 %v556
    %879 = vmatpush1.msra.mxu0 %v555
    %880 = vmatprep.subr.mxu0 %v552
    %881 = vmatpush1.msra.mxu0 %v551
    %882 = vmatprep.subr.mxu0 %v548
    %883 = vmatpush1.msra.mxu0 %v547
    %884 = vmatprep.subr.mxu0 %v544
    %885 = vmatpush1.msra.mxu0 %v543
    %886 = vmatprep.subr.mxu0 %v540
    %887 = vmatpush1.msra.mxu0 %v539
    %888 = vmatprep.subr.mxu0 %v536
    %889 = vmatpush1.msra.mxu0 %v535
    %890 = vmatprep.subr.mxu0 %v532
    %891 = vmatpush1.msra.mxu0 %v531
    %892 = vmatprep.subr.mxu0 %v528
    %893 = vmatpush1.msra.mxu0 %v527
    %894 = vmatprep.subr.mxu0 %v524
    %895 = vmatpush1.msra.mxu0 %v523
    %896 = vmatprep.subr.mxu0 %v520
    %897 = vmatpush1.msra.mxu0 %v519
    %898 = vmatprep.subr.mxu0 %v516
    %899 = vmatpush1.msra.mxu0 %v515
    %900 = vmatprep.subr.mxu0 %v512
    %901 = vmatpush1.msra.mxu0 %v511
    %902 = vmatprep.subr.mxu0 0.0
    %903 = vmatpush2.msra.mxu0 0.0
    %904 = vmatprep.subr.mxu0 0.0
    %905 = vmatpush2.msra.mxu0 0.0
    %906 = vmatprep.subr.mxu0 0.0
    %907 = vmatpush2.msra.mxu0 0.0
    %908 = vmatprep.subr.mxu0 0.0
    %909 = vmatpush2.msra.mxu0 0.0
    %910 = vmatprep.subr.mxu0 0.0
    %911 = vmatpush2.msra.mxu0 0.0
    %912 = vmatprep.subr.mxu0 0.0
    %913 = vmatpush2.msra.mxu0 0.0
    %914 = vmatprep.subr.mxu0 0.0
    %915 = vmatpush2.msra.mxu0 0.0
    %916 = vmatprep.subr.mxu0 0.0
    %917 = vmatpush2.msra.mxu0 0.0
    %918 = vmatprep.subr.mxu0 0.0
    %919 = vmatpush2.msra.mxu0 0.0
    %920 = vmatprep.subr.mxu0 0.0
    %921 = vmatpush2.msra.mxu0 0.0
    %922 = vmatprep.subr.mxu0 0.0
    %923 = vmatpush2.msra.mxu0 0.0
    %924 = vmatprep.subr.mxu0 0.0
    %925 = vmatpush2.msra.mxu0 0.0
    %926 = vmatprep.subr.mxu0 0.0
    %927 = vmatpush2.msra.mxu0 0.0
    %928 = vmatprep.subr.mxu0 0.0
    %929 = vmatpush2.msra.mxu0 0.0
    %930 = vmatprep.subr.mxu0 0.0
    %931 = vmatpush2.msra.mxu0 0.0
    %932 = vmatprep.subr.mxu0 0.0
    %933 = vmatpush2.msra.mxu0 0.0
    %934 = vmatprep.mubr.f32.mxu0 0.0
    %935 = vmatmul.mubr.f32.gmra.mxu0 %v797
    %v936 = vpop.f32.mrf.mxu0
    %v937 = vadd.f32 0.0, %v936
    %v938 = vpop.f32.mrf.mxu0
    %v939 = vadd.f32 0.0, %v938
    %940 = vdwg.mxu0
    %v945 = vrot.slane %v866, 7
    %v946 = vrot.slane %v868, 7
    %v947 = vrot.slane %v937, 7
    %v948 = vrot.slane %v939, 7
    %v957 = vadd.f32 %v458, %v945
    %v958 = vadd.f32 %v460, %v946
    %v959 = vadd.f32 %v501, %v947
    %v960 = vadd.f32 %v503, %v948
    %v961 = vadd.f32 %v462, %v866
    %v962 = vadd.f32 %v464, %v868
    %v963 = vadd.f32 %v505, %v937
    %v964 = vadd.f32 %v507, %v939
    %v965 = vxor.u32 %v957, 2147483648
    %v966 = vxor.u32 %v958, 2147483648
    %v967 = vxor.u32 %v959, 2147483648
    %v968 = vxor.u32 %v961, 2147483648
    %v969 = vxor.u32 %v962, 2147483648
    %v970 = vxor.u32 %v963, 2147483648
    %v971 = vmul.f32 %v965, 1.442695
    %v972 = vpow.pop %v971
    %v973 = vmul.f32 %v966, 1.442695
    %v974 = vpow.pop %v973
    %v975 = vmul.f32 %v967, 1.442695
    %v976 = vpow.pop %v975
    %v977 = vmul.f32 %v968, 1.442695
    %v978 = vpow.pop %v977
    %v979 = vmul.f32 %v969, 1.442695
    %v980 = vpow.pop %v979
    %v981 = vmul.f32 %v970, 1.442695
    %v982 = vpow.pop %v981
    %v983 = vadd.f32 %v972, 1.0
    %v984 = vadd.f32 %v974, 1.0
    %v985 = vadd.f32 %v976, 1.0
    %v986 = vadd.f32 %v978, 1.0
    %v987 = vadd.f32 %v980, 1.0
    %v988 = vadd.f32 %v982, 1.0
    %v989 = vrcp.pop %v983
    %v990 = vmul.f32 1.0, %v989
    %v991 = vrcp.pop %v984
    %v992 = vmul.f32 1.0, %v991
    %v993 = vrcp.pop %v985
    %v994 = vmul.f32 1.0, %v993
    %v995 = vrcp.pop %v986
    %v996 = vmul.f32 1.0, %v995
    %v997 = vrcp.pop %v987
    %v998 = vmul.f32 1.0, %v997
    %v999 = vrcp.pop %v988
    %v1000 = vmul.f32 1.0, %v999
    %v1001 = vtanh.pop %v960
    %v1002 = vtanh.pop %v964
    %v1005 = vrot.slane %v787, 7
    %v1006 = vrot.slane %v788, 7
    %v1009 = vmul.f32 %v992, %v1005
    %v1010 = vmul.f32 %v998, %v1006
    %v1011 = vmul.f32 %v990, %v1001
    %v1012 = vmul.f32 %v996, %v1002
    %v1013 = vadd.f32 %v1009, %v1011
    %v1014 = vadd.f32 %v1010, %v1012
    %v1015 = vtanh.pop %v1013
    %v1016 = vtanh.pop %v1014
    %v1017 = vmul.f32 %v994, %v1015
    %v1018 = vmul.f32 %v1000, %v1016
    %v1021 = vrot.slane %v1017, 1
    %v1022 = vsel %vm796, %v1018, %v1021
    %1024 = vmatprep.subr.mxu0 %v570
    %1025 = vmatpush1.msra.mxu0 %v569
    %1026 = vmatprep.subr.mxu0 %v566
    %1027 = vmatpush1.msra.mxu0 %v565
    %1028 = vmatprep.subr.mxu0 %v562
    %1029 = vmatpush1.msra.mxu0 %v561
    %1030 = vmatprep.subr.mxu0 %v558
    %1031 = vmatpush1.msra.mxu0 %v557
    %1032 = vmatprep.subr.mxu0 %v554
    %1033 = vmatpush1.msra.mxu0 %v553
    %1034 = vmatprep.subr.mxu0 %v550
    %1035 = vmatpush1.msra.mxu0 %v549
    %1036 = vmatprep.subr.mxu0 %v546
    %1037 = vmatpush1.msra.mxu0 %v545
    %1038 = vmatprep.subr.mxu0 %v542
    %1039 = vmatpush1.msra.mxu0 %v541
    %1040 = vmatprep.subr.mxu0 %v538
    %1041 = vmatpush1.msra.mxu0 %v537
    %1042 = vmatprep.subr.mxu0 %v534
    %1043 = vmatpush1.msra.mxu0 %v533
    %1044 = vmatprep.subr.mxu0 %v530
    %1045 = vmatpush1.msra.mxu0 %v529
    %1046 = vmatprep.subr.mxu0 %v526
    %1047 = vmatpush1.msra.mxu0 %v525
    %1048 = vmatprep.subr.mxu0 %v522
    %1049 = vmatpush1.msra.mxu0 %v521
    %1050 = vmatprep.subr.mxu0 %v518
    %1051 = vmatpush1.msra.mxu0 %v517
    %1052 = vmatprep.subr.mxu0 %v514
    %1053 = vmatpush1.msra.mxu0 %v513
    %1054 = vmatprep.subr.mxu0 %v510
    %1055 = vmatpush1.msra.mxu0 %v509
    %1056 = vmatprep.subr.mxu0 0.0
    %1057 = vmatpush2.msra.mxu0 0.0
    %1058 = vmatprep.subr.mxu0 0.0
    %1059 = vmatpush2.msra.mxu0 0.0
    %1060 = vmatprep.subr.mxu0 0.0
    %1061 = vmatpush2.msra.mxu0 0.0
    %1062 = vmatprep.subr.mxu0 0.0
    %1063 = vmatpush2.msra.mxu0 0.0
    %1064 = vmatprep.subr.mxu0 0.0
    %1065 = vmatpush2.msra.mxu0 0.0
    %1066 = vmatprep.subr.mxu0 0.0
    %1067 = vmatpush2.msra.mxu0 0.0
    %1068 = vmatprep.subr.mxu0 0.0
    %1069 = vmatpush2.msra.mxu0 0.0
    %1070 = vmatprep.subr.mxu0 0.0
    %1071 = vmatpush2.msra.mxu0 0.0
    %1072 = vmatprep.subr.mxu0 0.0
    %1073 = vmatpush2.msra.mxu0 0.0
    %1074 = vmatprep.subr.mxu0 0.0
    %1075 = vmatpush2.msra.mxu0 0.0
    %1076 = vmatprep.subr.mxu0 0.0
    %1077 = vmatpush2.msra.mxu0 0.0
    %1078 = vmatprep.subr.mxu0 0.0
    %1079 = vmatpush2.msra.mxu0 0.0
    %1080 = vmatprep.subr.mxu0 0.0
    %1081 = vmatpush2.msra.mxu0 0.0
    %1082 = vmatprep.subr.mxu0 0.0
    %1083 = vmatpush2.msra.mxu0 0.0
    %1084 = vmatprep.subr.mxu0 0.0
    %1085 = vmatpush2.msra.mxu0 0.0
    %1086 = vmatprep.subr.mxu0 0.0
    %1087 = vmatpush2.msra.mxu0 0.0
    %1088 = vmatprep.mubr.f32.mxu0 0.0
    %1089 = vmatmul.mubr.f32.gmra.mxu0 %v1022
    %v1090 = vpop.f32.mrf.mxu0
    %v1091 = vadd.f32 0.0, %v1090
    %v1092 = vpop.f32.mrf.mxu0
    %v1093 = vadd.f32 0.0, %v1092
    %1094 = vdwg.mxu0
    %1095 = vmatprep.subr.mxu0 %v572
    %1096 = vmatpush1.msra.mxu0 %v571
    %1097 = vmatprep.subr.mxu0 %v568
    %1098 = vmatpush1.msra.mxu0 %v567
    %1099 = vmatprep.subr.mxu0 %v564
    %1100 = vmatpush1.msra.mxu0 %v563
    %1101 = vmatprep.subr.mxu0 %v560
    %1102 = vmatpush1.msra.mxu0 %v559
    %1103 = vmatprep.subr.mxu0 %v556
    %1104 = vmatpush1.msra.mxu0 %v555
    %1105 = vmatprep.subr.mxu0 %v552
    %1106 = vmatpush1.msra.mxu0 %v551
    %1107 = vmatprep.subr.mxu0 %v548
    %1108 = vmatpush1.msra.mxu0 %v547
    %1109 = vmatprep.subr.mxu0 %v544
    %1110 = vmatpush1.msra.mxu0 %v543
    %1111 = vmatprep.subr.mxu0 %v540
    %1112 = vmatpush1.msra.mxu0 %v539
    %1113 = vmatprep.subr.mxu0 %v536
    %1114 = vmatpush1.msra.mxu0 %v535
    %1115 = vmatprep.subr.mxu0 %v532
    %1116 = vmatpush1.msra.mxu0 %v531
    %1117 = vmatprep.subr.mxu0 %v528
    %1118 = vmatpush1.msra.mxu0 %v527
    %1119 = vmatprep.subr.mxu0 %v524
    %1120 = vmatpush1.msra.mxu0 %v523
    %1121 = vmatprep.subr.mxu0 %v520
    %1122 = vmatpush1.msra.mxu0 %v519
    %1123 = vmatprep.subr.mxu0 %v516
    %1124 = vmatpush1.msra.mxu0 %v515
    %1125 = vmatprep.subr.mxu0 %v512
    %1126 = vmatpush1.msra.mxu0 %v511
    %1127 = vmatprep.subr.mxu0 0.0
    %1128 = vmatpush2.msra.mxu0 0.0
    %1129 = vmatprep.subr.mxu0 0.0
    %1130 = vmatpush2.msra.mxu0 0.0
    %1131 = vmatprep.subr.mxu0 0.0
    %1132 = vmatpush2.msra.mxu0 0.0
    %1133 = vmatprep.subr.mxu0 0.0
    %1134 = vmatpush2.msra.mxu0 0.0
    %1135 = vmatprep.subr.mxu0 0.0
    %1136 = vmatpush2.msra.mxu0 0.0
    %1137 = vmatprep.subr.mxu0 0.0
    %1138 = vmatpush2.msra.mxu0 0.0
    %1139 = vmatprep.subr.mxu0 0.0
    %1140 = vmatpush2.msra.mxu0 0.0
    %1141 = vmatprep.subr.mxu0 0.0
    %1142 = vmatpush2.msra.mxu0 0.0
    %1143 = vmatprep.subr.mxu0 0.0
    %1144 = vmatpush2.msra.mxu0 0.0
    %1145 = vmatprep.subr.mxu0 0.0
    %1146 = vmatpush2.msra.mxu0 0.0
    %1147 = vmatprep.subr.mxu0 0.0
    %1148 = vmatpush2.msra.mxu0 0.0
    %1149 = vmatprep.subr.mxu0 0.0
    %1150 = vmatpush2.msra.mxu0 0.0
    %1151 = vmatprep.subr.mxu0 0.0
    %1152 = vmatpush2.msra.mxu0 0.0
    %1153 = vmatprep.subr.mxu0 0.0
    %1154 = vmatpush2.msra.mxu0 0.0
    %1155 = vmatprep.subr.mxu0 0.0
    %1156 = vmatpush2.msra.mxu0 0.0
    %1157 = vmatprep.subr.mxu0 0.0
    %1158 = vmatpush2.msra.mxu0 0.0
    %1159 = vmatprep.mubr.f32.mxu0 0.0
    %1160 = vmatmul.mubr.f32.gmra.mxu0 %v1022
    %v1161 = vpop.f32.mrf.mxu0
    %v1162 = vadd.f32 0.0, %v1161
    %v1163 = vpop.f32.mrf.mxu0
    %v1164 = vadd.f32 0.0, %v1163
    %1165 = vdwg.mxu0
    %v1170 = vrot.slane %v1091, 6
    %v1171 = vrot.slane %v1093, 6
    %v1172 = vrot.slane %v1162, 6
    %v1173 = vrot.slane %v1164, 6
    %v1174 = vrot.slane %v1091, 7
    %v1175 = vrot.slane %v1093, 7
    %v1176 = vrot.slane %v1162, 7
    %v1177 = vrot.slane %v1164, 7
    %v1186 = vadd.f32 %v458, %v1170
    %v1187 = vadd.f32 %v460, %v1171
    %v1188 = vadd.f32 %v501, %v1172
    %v1189 = vadd.f32 %v503, %v1173
    %v1190 = vadd.f32 %v462, %v1174
    %v1191 = vadd.f32 %v464, %v1175
    %v1192 = vadd.f32 %v505, %v1176
    %v1193 = vadd.f32 %v507, %v1177
    %v1194 = vxor.u32 %v1186, 2147483648
    %v1195 = vxor.u32 %v1187, 2147483648
    %v1196 = vxor.u32 %v1188, 2147483648
    %v1197 = vxor.u32 %v1190, 2147483648
    %v1198 = vxor.u32 %v1191, 2147483648
    %v1199 = vxor.u32 %v1192, 2147483648
    %v1200 = vmul.f32 %v1194, 1.442695
    %v1201 = vpow.pop %v1200
    %v1202 = vmul.f32 %v1195, 1.442695
    %v1203 = vpow.pop %v1202
    %v1204 = vmul.f32 %v1196, 1.442695
    %v1205 = vpow.pop %v1204
    %v1206 = vmul.f32 %v1197, 1.442695
    %v1207 = vpow.pop %v1206
    %v1208 = vmul.f32 %v1198, 1.442695
    %v1209 = vpow.pop %v1208
    %v1210 = vmul.f32 %v1199, 1.442695
    %v1211 = vpow.pop %v1210
    %v1212 = vadd.f32 %v1201, 1.0
    %v1213 = vadd.f32 %v1203, 1.0
    %v1214 = vadd.f32 %v1205, 1.0
    %v1215 = vadd.f32 %v1207, 1.0
    %v1216 = vadd.f32 %v1209, 1.0
    %v1217 = vadd.f32 %v1211, 1.0
    %v1218 = vrcp.pop %v1212
    %v1219 = vmul.f32 1.0, %v1218
    %v1220 = vrcp.pop %v1213
    %v1221 = vmul.f32 1.0, %v1220
    %v1222 = vrcp.pop %v1214
    %v1223 = vmul.f32 1.0, %v1222
    %v1224 = vrcp.pop %v1215
    %v1225 = vmul.f32 1.0, %v1224
    %v1226 = vrcp.pop %v1216
    %v1227 = vmul.f32 1.0, %v1226
    %v1228 = vrcp.pop %v1217
    %v1229 = vmul.f32 1.0, %v1228
    %v1230 = vtanh.pop %v1189
    %v1231 = vtanh.pop %v1193
    %v1234 = vrot.slane %v1013, 7
    %v1235 = vrot.slane %v1014, 7
    %v1238 = vmul.f32 %v1221, %v1234
    %v1239 = vmul.f32 %v1227, %v1235
    %v1240 = vmul.f32 %v1219, %v1230
    %v1241 = vmul.f32 %v1225, %v1231
    %v1242 = vadd.f32 %v1238, %v1240
    %v1243 = vadd.f32 %v1239, %v1241
    %v1244 = vtanh.pop %v1242
    %v1245 = vtanh.pop %v1243
    %v1246 = vmul.f32 %v1223, %v1244
    %v1247 = vmul.f32 %v1229, %v1245
    %v1250 = vrot.slane %v1246, 2
    %v1251 = vrot.slane %v1247, 1
    %v1252 = vsel %vm796, %v1251, %v1250
    %1254 = vmatprep.subr.mxu0 %v570
    %1255 = vmatpush1.msra.mxu0 %v569
    %1256 = vmatprep.subr.mxu0 %v566
    %1257 = vmatpush1.msra.mxu0 %v565
    %1258 = vmatprep.subr.mxu0 %v562
    %1259 = vmatpush1.msra.mxu0 %v561
    %1260 = vmatprep.subr.mxu0 %v558
    %1261 = vmatpush1.msra.mxu0 %v557
    %1262 = vmatprep.subr.mxu0 %v554
    %1263 = vmatpush1.msra.mxu0 %v553
    %1264 = vmatprep.subr.mxu0 %v550
    %1265 = vmatpush1.msra.mxu0 %v549
    %1266 = vmatprep.subr.mxu0 %v546
    %1267 = vmatpush1.msra.mxu0 %v545
    %1268 = vmatprep.subr.mxu0 %v542
    %1269 = vmatpush1.msra.mxu0 %v541
    %1270 = vmatprep.subr.mxu0 %v538
    %1271 = vmatpush1.msra.mxu0 %v537
    %1272 = vmatprep.subr.mxu0 %v534
    %1273 = vmatpush1.msra.mxu0 %v533
    %1274 = vmatprep.subr.mxu0 %v530
    %1275 = vmatpush1.msra.mxu0 %v529
    %1276 = vmatprep.subr.mxu0 %v526
    %1277 = vmatpush1.msra.mxu0 %v525
    %1278 = vmatprep.subr.mxu0 %v522
    %1279 = vmatpush1.msra.mxu0 %v521
    %1280 = vmatprep.subr.mxu0 %v518
    %1281 = vmatpush1.msra.mxu0 %v517
    %1282 = vmatprep.subr.mxu0 %v514
    %1283 = vmatpush1.msra.mxu0 %v513
    %1284 = vmatprep.subr.mxu0 %v510
    %1285 = vmatpush1.msra.mxu0 %v509
    %1286 = vmatprep.subr.mxu0 0.0
    %1287 = vmatpush2.msra.mxu0 0.0
    %1288 = vmatprep.subr.mxu0 0.0
    %1289 = vmatpush2.msra.mxu0 0.0
    %1290 = vmatprep.subr.mxu0 0.0
    %1291 = vmatpush2.msra.mxu0 0.0
    %1292 = vmatprep.subr.mxu0 0.0
    %1293 = vmatpush2.msra.mxu0 0.0
    %1294 = vmatprep.subr.mxu0 0.0
    %1295 = vmatpush2.msra.mxu0 0.0
    %1296 = vmatprep.subr.mxu0 0.0
    %1297 = vmatpush2.msra.mxu0 0.0
    %1298 = vmatprep.subr.mxu0 0.0
    %1299 = vmatpush2.msra.mxu0 0.0
    %1300 = vmatprep.subr.mxu0 0.0
    %1301 = vmatpush2.msra.mxu0 0.0
    %1302 = vmatprep.subr.mxu0 0.0
    %1303 = vmatpush2.msra.mxu0 0.0
    %1304 = vmatprep.subr.mxu0 0.0
    %1305 = vmatpush2.msra.mxu0 0.0
    %1306 = vmatprep.subr.mxu0 0.0
    %1307 = vmatpush2.msra.mxu0 0.0
    %1308 = vmatprep.subr.mxu0 0.0
    %1309 = vmatpush2.msra.mxu0 0.0
    %1310 = vmatprep.subr.mxu0 0.0
    %1311 = vmatpush2.msra.mxu0 0.0
    %1312 = vmatprep.subr.mxu0 0.0
    %1313 = vmatpush2.msra.mxu0 0.0
    %1314 = vmatprep.subr.mxu0 0.0
    %1315 = vmatpush2.msra.mxu0 0.0
    %1316 = vmatprep.subr.mxu0 0.0
    %1317 = vmatpush2.msra.mxu0 0.0
    %1318 = vmatprep.mubr.f32.mxu0 0.0
    %1319 = vmatmul.mubr.f32.gmra.mxu0 %v1252
    %v1320 = vpop.f32.mrf.mxu0
    %v1321 = vadd.f32 0.0, %v1320
    %v1322 = vpop.f32.mrf.mxu0
    %v1323 = vadd.f32 0.0, %v1322
    %1324 = vdwg.mxu0
    %1325 = vmatprep.subr.mxu0 %v572
    %1326 = vmatpush1.msra.mxu0 %v571
    %1327 = vmatprep.subr.mxu0 %v568
    %1328 = vmatpush1.msra.mxu0 %v567
    %1329 = vmatprep.subr.mxu0 %v564
    %1330 = vmatpush1.msra.mxu0 %v563
    %1331 = vmatprep.subr.mxu0 %v560
    %1332 = vmatpush1.msra.mxu0 %v559
    %1333 = vmatprep.subr.mxu0 %v556
    %1334 = vmatpush1.msra.mxu0 %v555
    %1335 = vmatprep.subr.mxu0 %v552
    %1336 = vmatpush1.msra.mxu0 %v551
    %1337 = vmatprep.subr.mxu0 %v548
    %1338 = vmatpush1.msra.mxu0 %v547
    %1339 = vmatprep.subr.mxu0 %v544
    %1340 = vmatpush1.msra.mxu0 %v543
    %1341 = vmatprep.subr.mxu0 %v540
    %1342 = vmatpush1.msra.mxu0 %v539
    %1343 = vmatprep.subr.mxu0 %v536
    %1344 = vmatpush1.msra.mxu0 %v535
    %1345 = vmatprep.subr.mxu0 %v532
    %1346 = vmatpush1.msra.mxu0 %v531
    %1347 = vmatprep.subr.mxu0 %v528
    %1348 = vmatpush1.msra.mxu0 %v527
    %1349 = vmatprep.subr.mxu0 %v524
    %1350 = vmatpush1.msra.mxu0 %v523
    %1351 = vmatprep.subr.mxu0 %v520
    %1352 = vmatpush1.msra.mxu0 %v519
    %1353 = vmatprep.subr.mxu0 %v516
    %1354 = vmatpush1.msra.mxu0 %v515
    %1355 = vmatprep.subr.mxu0 %v512
    %1356 = vmatpush1.msra.mxu0 %v511
    %1357 = vmatprep.subr.mxu0 0.0
    %1358 = vmatpush2.msra.mxu0 0.0
    %1359 = vmatprep.subr.mxu0 0.0
    %1360 = vmatpush2.msra.mxu0 0.0
    %1361 = vmatprep.subr.mxu0 0.0
    %1362 = vmatpush2.msra.mxu0 0.0
    %1363 = vmatprep.subr.mxu0 0.0
    %1364 = vmatpush2.msra.mxu0 0.0
    %1365 = vmatprep.subr.mxu0 0.0
    %1366 = vmatpush2.msra.mxu0 0.0
    %1367 = vmatprep.subr.mxu0 0.0
    %1368 = vmatpush2.msra.mxu0 0.0
    %1369 = vmatprep.subr.mxu0 0.0
    %1370 = vmatpush2.msra.mxu0 0.0
    %1371 = vmatprep.subr.mxu0 0.0
    %1372 = vmatpush2.msra.mxu0 0.0
    %1373 = vmatprep.subr.mxu0 0.0
    %1374 = vmatpush2.msra.mxu0 0.0
    %1375 = vmatprep.subr.mxu0 0.0
    %1376 = vmatpush2.msra.mxu0 0.0
    %1377 = vmatprep.subr.mxu0 0.0
    %1378 = vmatpush2.msra.mxu0 0.0
    %1379 = vmatprep.subr.mxu0 0.0
    %1380 = vmatpush2.msra.mxu0 0.0
    %1381 = vmatprep.subr.mxu0 0.0
    %1382 = vmatpush2.msra.mxu0 0.0
    %1383 = vmatprep.subr.mxu0 0.0
    %1384 = vmatpush2.msra.mxu0 0.0
    %1385 = vmatprep.subr.mxu0 0.0
    %1386 = vmatpush2.msra.mxu0 0.0
    %1387 = vmatprep.subr.mxu0 0.0
    %1388 = vmatpush2.msra.mxu0 0.0
    %1389 = vmatprep.mubr.f32.mxu0 0.0
    %1390 = vmatmul.mubr.f32.gmra.mxu0 %v1252
    %v1391 = vpop.f32.mrf.mxu0
    %v1392 = vadd.f32 0.0, %v1391
    %v1393 = vpop.f32.mrf.mxu0
    %v1394 = vadd.f32 0.0, %v1393
    %1395 = vdwg.mxu0
    %v1400 = vrot.slane %v1321, 5
    %v1401 = vrot.slane %v1323, 5
    %v1402 = vrot.slane %v1392, 5
    %v1403 = vrot.slane %v1394, 5
    %v1404 = vrot.slane %v1321, 6
    %v1405 = vrot.slane %v1323, 6
    %v1406 = vrot.slane %v1392, 6
    %v1407 = vrot.slane %v1394, 6
    %v1416 = vadd.f32 %v458, %v1400
    %v1417 = vadd.f32 %v460, %v1401
    %v1418 = vadd.f32 %v501, %v1402
    %v1419 = vadd.f32 %v503, %v1403
    %v1420 = vadd.f32 %v462, %v1404
    %v1421 = vadd.f32 %v464, %v1405
    %v1422 = vadd.f32 %v505, %v1406
    %v1423 = vadd.f32 %v507, %v1407
    %v1424 = vxor.u32 %v1416, 2147483648
    %v1425 = vxor.u32 %v1417, 2147483648
    %v1426 = vxor.u32 %v1418, 2147483648
    %v1427 = vxor.u32 %v1420, 2147483648
    %v1428 = vxor.u32 %v1421, 2147483648
    %v1429 = vxor.u32 %v1422, 2147483648
    %v1430 = vmul.f32 %v1424, 1.442695
    %v1431 = vpow.pop %v1430
    %v1432 = vmul.f32 %v1425, 1.442695
    %v1433 = vpow.pop %v1432
    %v1434 = vmul.f32 %v1426, 1.442695
    %v1435 = vpow.pop %v1434
    %v1436 = vmul.f32 %v1427, 1.442695
    %v1437 = vpow.pop %v1436
    %v1438 = vmul.f32 %v1428, 1.442695
    %v1439 = vpow.pop %v1438
    %v1440 = vmul.f32 %v1429, 1.442695
    %v1441 = vpow.pop %v1440
    %v1442 = vadd.f32 %v1431, 1.0
    %v1443 = vadd.f32 %v1433, 1.0
    %v1444 = vadd.f32 %v1435, 1.0
    %v1445 = vadd.f32 %v1437, 1.0
    %v1446 = vadd.f32 %v1439, 1.0
    %v1447 = vadd.f32 %v1441, 1.0
    %v1448 = vrcp.pop %v1442
    %v1449 = vmul.f32 1.0, %v1448
    %v1450 = vrcp.pop %v1443
    %v1451 = vmul.f32 1.0, %v1450
    %v1452 = vrcp.pop %v1444
    %v1453 = vmul.f32 1.0, %v1452
    %v1454 = vrcp.pop %v1445
    %v1455 = vmul.f32 1.0, %v1454
    %v1456 = vrcp.pop %v1446
    %v1457 = vmul.f32 1.0, %v1456
    %v1458 = vrcp.pop %v1447
    %v1459 = vmul.f32 1.0, %v1458
    %v1460 = vtanh.pop %v1419
    %v1461 = vtanh.pop %v1423
    %v1464 = vrot.slane %v1242, 7
    %v1465 = vrot.slane %v1243, 7
    %v1468 = vmul.f32 %v1451, %v1464
    %v1469 = vmul.f32 %v1457, %v1465
    %v1470 = vmul.f32 %v1449, %v1460
    %v1471 = vmul.f32 %v1455, %v1461
    %v1472 = vadd.f32 %v1468, %v1470
    %v1473 = vadd.f32 %v1469, %v1471
    %v1474 = vtanh.pop %v1472
    %v1475 = vtanh.pop %v1473
    %v1476 = vmul.f32 %v1453, %v1474
    %v1477 = vmul.f32 %v1459, %v1475
    %v1480 = vrot.slane %v1476, 3
    %v1481 = vrot.slane %v1477, 2
    %v1482 = vsel %vm796, %v1481, %v1480
    %1484 = vmatprep.subr.mxu0 %v570
    %1485 = vmatpush1.msra.mxu0 %v569
    %1486 = vmatprep.subr.mxu0 %v566
    %1487 = vmatpush1.msra.mxu0 %v565
    %1488 = vmatprep.subr.mxu0 %v562
    %1489 = vmatpush1.msra.mxu0 %v561
    %1490 = vmatprep.subr.mxu0 %v558
    %1491 = vmatpush1.msra.mxu0 %v557
    %1492 = vmatprep.subr.mxu0 %v554
    %1493 = vmatpush1.msra.mxu0 %v553
    %1494 = vmatprep.subr.mxu0 %v550
    %1495 = vmatpush1.msra.mxu0 %v549
    %1496 = vmatprep.subr.mxu0 %v546
    %1497 = vmatpush1.msra.mxu0 %v545
    %1498 = vmatprep.subr.mxu0 %v542
    %1499 = vmatpush1.msra.mxu0 %v541
    %1500 = vmatprep.subr.mxu0 %v538
    %1501 = vmatpush1.msra.mxu0 %v537
    %1502 = vmatprep.subr.mxu0 %v534
    %1503 = vmatpush1.msra.mxu0 %v533
    %1504 = vmatprep.subr.mxu0 %v530
    %1505 = vmatpush1.msra.mxu0 %v529
    %1506 = vmatprep.subr.mxu0 %v526
    %1507 = vmatpush1.msra.mxu0 %v525
    %1508 = vmatprep.subr.mxu0 %v522
    %1509 = vmatpush1.msra.mxu0 %v521
    %1510 = vmatprep.subr.mxu0 %v518
    %1511 = vmatpush1.msra.mxu0 %v517
    %1512 = vmatprep.subr.mxu0 %v514
    %1513 = vmatpush1.msra.mxu0 %v513
    %1514 = vmatprep.subr.mxu0 %v510
    %1515 = vmatpush1.msra.mxu0 %v509
    %1516 = vmatprep.subr.mxu0 0.0
    %1517 = vmatpush2.msra.mxu0 0.0
    %1518 = vmatprep.subr.mxu0 0.0
    %1519 = vmatpush2.msra.mxu0 0.0
    %1520 = vmatprep.subr.mxu0 0.0
    %1521 = vmatpush2.msra.mxu0 0.0
    %1522 = vmatprep.subr.mxu0 0.0
    %1523 = vmatpush2.msra.mxu0 0.0
    %1524 = vmatprep.subr.mxu0 0.0
    %1525 = vmatpush2.msra.mxu0 0.0
    %1526 = vmatprep.subr.mxu0 0.0
    %1527 = vmatpush2.msra.mxu0 0.0
    %1528 = vmatprep.subr.mxu0 0.0
    %1529 = vmatpush2.msra.mxu0 0.0
    %1530 = vmatprep.subr.mxu0 0.0
    %1531 = vmatpush2.msra.mxu0 0.0
    %1532 = vmatprep.subr.mxu0 0.0
    %1533 = vmatpush2.msra.mxu0 0.0
    %1534 = vmatprep.subr.mxu0 0.0
    %1535 = vmatpush2.msra.mxu0 0.0
    %1536 = vmatprep.subr.mxu0 0.0
    %1537 = vmatpush2.msra.mxu0 0.0
    %1538 = vmatprep.subr.mxu0 0.0
    %1539 = vmatpush2.msra.mxu0 0.0
    %1540 = vmatprep.subr.mxu0 0.0
    %1541 = vmatpush2.msra.mxu0 0.0
    %1542 = vmatprep.subr.mxu0 0.0
    %1543 = vmatpush2.msra.mxu0 0.0
    %1544 = vmatprep.subr.mxu0 0.0
    %1545 = vmatpush2.msra.mxu0 0.0
    %1546 = vmatprep.subr.mxu0 0.0
    %1547 = vmatpush2.msra.mxu0 0.0
    %1548 = vmatprep.mubr.f32.mxu0 0.0
    %1549 = vmatmul.mubr.f32.gmra.mxu0 %v1482
    %v1550 = vpop.f32.mrf.mxu0
    %v1551 = vadd.f32 0.0, %v1550
    %v1552 = vpop.f32.mrf.mxu0
    %v1553 = vadd.f32 0.0, %v1552
    %1554 = vdwg.mxu0
    %1555 = vmatprep.subr.mxu0 %v572
    %1556 = vmatpush1.msra.mxu0 %v571
    %1557 = vmatprep.subr.mxu0 %v568
    %1558 = vmatpush1.msra.mxu0 %v567
    %1559 = vmatprep.subr.mxu0 %v564
    %1560 = vmatpush1.msra.mxu0 %v563
    %1561 = vmatprep.subr.mxu0 %v560
    %1562 = vmatpush1.msra.mxu0 %v559
    %1563 = vmatprep.subr.mxu0 %v556
    %1564 = vmatpush1.msra.mxu0 %v555
    %1565 = vmatprep.subr.mxu0 %v552
    %1566 = vmatpush1.msra.mxu0 %v551
    %1567 = vmatprep.subr.mxu0 %v548
    %1568 = vmatpush1.msra.mxu0 %v547
    %1569 = vmatprep.subr.mxu0 %v544
    %1570 = vmatpush1.msra.mxu0 %v543
    %1571 = vmatprep.subr.mxu0 %v540
    %1572 = vmatpush1.msra.mxu0 %v539
    %1573 = vmatprep.subr.mxu0 %v536
    %1574 = vmatpush1.msra.mxu0 %v535
    %1575 = vmatprep.subr.mxu0 %v532
    %1576 = vmatpush1.msra.mxu0 %v531
    %1577 = vmatprep.subr.mxu0 %v528
    %1578 = vmatpush1.msra.mxu0 %v527
    %1579 = vmatprep.subr.mxu0 %v524
    %1580 = vmatpush1.msra.mxu0 %v523
    %1581 = vmatprep.subr.mxu0 %v520
    %1582 = vmatpush1.msra.mxu0 %v519
    %1583 = vmatprep.subr.mxu0 %v516
    %1584 = vmatpush1.msra.mxu0 %v515
    %1585 = vmatprep.subr.mxu0 %v512
    %1586 = vmatpush1.msra.mxu0 %v511
    %1587 = vmatprep.subr.mxu0 0.0
    %1588 = vmatpush2.msra.mxu0 0.0
    %1589 = vmatprep.subr.mxu0 0.0
    %1590 = vmatpush2.msra.mxu0 0.0
    %1591 = vmatprep.subr.mxu0 0.0
    %1592 = vmatpush2.msra.mxu0 0.0
    %1593 = vmatprep.subr.mxu0 0.0
    %1594 = vmatpush2.msra.mxu0 0.0
    %1595 = vmatprep.subr.mxu0 0.0
    %1596 = vmatpush2.msra.mxu0 0.0
    %1597 = vmatprep.subr.mxu0 0.0
    %1598 = vmatpush2.msra.mxu0 0.0
    %1599 = vmatprep.subr.mxu0 0.0
    %1600 = vmatpush2.msra.mxu0 0.0
    %1601 = vmatprep.subr.mxu0 0.0
    %1602 = vmatpush2.msra.mxu0 0.0
    %1603 = vmatprep.subr.mxu0 0.0
    %1604 = vmatpush2.msra.mxu0 0.0
    %1605 = vmatprep.subr.mxu0 0.0
    %1606 = vmatpush2.msra.mxu0 0.0
    %1607 = vmatprep.subr.mxu0 0.0
    %1608 = vmatpush2.msra.mxu0 0.0
    %1609 = vmatprep.subr.mxu0 0.0
    %1610 = vmatpush2.msra.mxu0 0.0
    %1611 = vmatprep.subr.mxu0 0.0
    %1612 = vmatpush2.msra.mxu0 0.0
    %1613 = vmatprep.subr.mxu0 0.0
    %1614 = vmatpush2.msra.mxu0 0.0
    %1615 = vmatprep.subr.mxu0 0.0
    %1616 = vmatpush2.msra.mxu0 0.0
    %1617 = vmatprep.subr.mxu0 0.0
    %1618 = vmatpush2.msra.mxu0 0.0
    %1619 = vmatprep.mubr.f32.mxu0 0.0
    %1620 = vmatmul.mubr.f32.gmra.mxu0 %v1482
    %v1621 = vpop.f32.mrf.mxu0
    %v1622 = vadd.f32 0.0, %v1621
    %v1623 = vpop.f32.mrf.mxu0
    %v1624 = vadd.f32 0.0, %v1623
    %1625 = vdwg.mxu0
    %v1630 = vrot.slane %v1551, 4
    %v1631 = vrot.slane %v1553, 4
    %v1632 = vrot.slane %v1622, 4
    %v1633 = vrot.slane %v1624, 4
    %v1634 = vrot.slane %v1551, 5
    %v1635 = vrot.slane %v1553, 5
    %v1636 = vrot.slane %v1622, 5
    %v1637 = vrot.slane %v1624, 5
    %v1646 = vadd.f32 %v458, %v1630
    %v1647 = vadd.f32 %v460, %v1631
    %v1648 = vadd.f32 %v501, %v1632
    %v1649 = vadd.f32 %v503, %v1633
    %v1650 = vadd.f32 %v462, %v1634
    %v1651 = vadd.f32 %v464, %v1635
    %v1652 = vadd.f32 %v505, %v1636
    %v1653 = vadd.f32 %v507, %v1637
    %v1654 = vxor.u32 %v1646, 2147483648
    %v1655 = vxor.u32 %v1647, 2147483648
    %v1656 = vxor.u32 %v1648, 2147483648
    %v1657 = vxor.u32 %v1650, 2147483648
    %v1658 = vxor.u32 %v1651, 2147483648
    %v1659 = vxor.u32 %v1652, 2147483648
    %v1660 = vmul.f32 %v1654, 1.442695
    %v1661 = vpow.pop %v1660
    %v1662 = vmul.f32 %v1655, 1.442695
    %v1663 = vpow.pop %v1662
    %v1664 = vmul.f32 %v1656, 1.442695
    %v1665 = vpow.pop %v1664
    %v1666 = vmul.f32 %v1657, 1.442695
    %v1667 = vpow.pop %v1666
    %v1668 = vmul.f32 %v1658, 1.442695
    %v1669 = vpow.pop %v1668
    %v1670 = vmul.f32 %v1659, 1.442695
    %v1671 = vpow.pop %v1670
    %v1672 = vadd.f32 %v1661, 1.0
    %v1673 = vadd.f32 %v1663, 1.0
    %v1674 = vadd.f32 %v1665, 1.0
    %v1675 = vadd.f32 %v1667, 1.0
    %v1676 = vadd.f32 %v1669, 1.0
    %v1677 = vadd.f32 %v1671, 1.0
    %v1678 = vrcp.pop %v1672
    %v1679 = vmul.f32 1.0, %v1678
    %v1680 = vrcp.pop %v1673
    %v1681 = vmul.f32 1.0, %v1680
    %v1682 = vrcp.pop %v1674
    %v1683 = vmul.f32 1.0, %v1682
    %v1684 = vrcp.pop %v1675
    %v1685 = vmul.f32 1.0, %v1684
    %v1686 = vrcp.pop %v1676
    %v1687 = vmul.f32 1.0, %v1686
    %v1688 = vrcp.pop %v1677
    %v1689 = vmul.f32 1.0, %v1688
    %v1690 = vtanh.pop %v1649
    %v1691 = vtanh.pop %v1653
    %v1694 = vrot.slane %v1472, 7
    %v1695 = vrot.slane %v1473, 7
    %v1698 = vmul.f32 %v1681, %v1694
    %v1699 = vmul.f32 %v1687, %v1695
    %v1700 = vmul.f32 %v1679, %v1690
    %v1701 = vmul.f32 %v1685, %v1691
    %v1702 = vadd.f32 %v1698, %v1700
    %v1703 = vadd.f32 %v1699, %v1701
    %v1704 = vtanh.pop %v1702
    %v1705 = vtanh.pop %v1703
    %v1706 = vmul.f32 %v1683, %v1704
    %v1707 = vmul.f32 %v1689, %v1705
    %v1710 = vrot.slane %v1706, 4
    %v1711 = vrot.slane %v1707, 3
    %v1712 = vsel %vm796, %v1711, %v1710
    %1714 = vmatprep.subr.mxu0 %v570
    %1715 = vmatpush1.msra.mxu0 %v569
    %1716 = vmatprep.subr.mxu0 %v566
    %1717 = vmatpush1.msra.mxu0 %v565
    %1718 = vmatprep.subr.mxu0 %v562
    %1719 = vmatpush1.msra.mxu0 %v561
    %1720 = vmatprep.subr.mxu0 %v558
    %1721 = vmatpush1.msra.mxu0 %v557
    %1722 = vmatprep.subr.mxu0 %v554
    %1723 = vmatpush1.msra.mxu0 %v553
    %1724 = vmatprep.subr.mxu0 %v550
    %1725 = vmatpush1.msra.mxu0 %v549
    %1726 = vmatprep.subr.mxu0 %v546
    %1727 = vmatpush1.msra.mxu0 %v545
    %1728 = vmatprep.subr.mxu0 %v542
    %1729 = vmatpush1.msra.mxu0 %v541
    %1730 = vmatprep.subr.mxu0 %v538
    %1731 = vmatpush1.msra.mxu0 %v537
    %1732 = vmatprep.subr.mxu0 %v534
    %1733 = vmatpush1.msra.mxu0 %v533
    %1734 = vmatprep.subr.mxu0 %v530
    %1735 = vmatpush1.msra.mxu0 %v529
    %1736 = vmatprep.subr.mxu0 %v526
    %1737 = vmatpush1.msra.mxu0 %v525
    %1738 = vmatprep.subr.mxu0 %v522
    %1739 = vmatpush1.msra.mxu0 %v521
    %1740 = vmatprep.subr.mxu0 %v518
    %1741 = vmatpush1.msra.mxu0 %v517
    %1742 = vmatprep.subr.mxu0 %v514
    %1743 = vmatpush1.msra.mxu0 %v513
    %1744 = vmatprep.subr.mxu0 %v510
    %1745 = vmatpush1.msra.mxu0 %v509
    %1746 = vmatprep.subr.mxu0 0.0
    %1747 = vmatpush2.msra.mxu0 0.0
    %1748 = vmatprep.subr.mxu0 0.0
    %1749 = vmatpush2.msra.mxu0 0.0
    %1750 = vmatprep.subr.mxu0 0.0
    %1751 = vmatpush2.msra.mxu0 0.0
    %1752 = vmatprep.subr.mxu0 0.0
    %1753 = vmatpush2.msra.mxu0 0.0
    %1754 = vmatprep.subr.mxu0 0.0
    %1755 = vmatpush2.msra.mxu0 0.0
    %1756 = vmatprep.subr.mxu0 0.0
    %1757 = vmatpush2.msra.mxu0 0.0
    %1758 = vmatprep.subr.mxu0 0.0
    %1759 = vmatpush2.msra.mxu0 0.0
    %1760 = vmatprep.subr.mxu0 0.0
    %1761 = vmatpush2.msra.mxu0 0.0
    %1762 = vmatprep.subr.mxu0 0.0
    %1763 = vmatpush2.msra.mxu0 0.0
    %1764 = vmatprep.subr.mxu0 0.0
    %1765 = vmatpush2.msra.mxu0 0.0
    %1766 = vmatprep.subr.mxu0 0.0
    %1767 = vmatpush2.msra.mxu0 0.0
    %1768 = vmatprep.subr.mxu0 0.0
    %1769 = vmatpush2.msra.mxu0 0.0
    %1770 = vmatprep.subr.mxu0 0.0
    %1771 = vmatpush2.msra.mxu0 0.0
    %1772 = vmatprep.subr.mxu0 0.0
    %1773 = vmatpush2.msra.mxu0 0.0
    %1774 = vmatprep.subr.mxu0 0.0
    %1775 = vmatpush2.msra.mxu0 0.0
    %1776 = vmatprep.subr.mxu0 0.0
    %1777 = vmatpush2.msra.mxu0 0.0
    %1778 = vmatprep.mubr.f32.mxu0 0.0
    %1779 = vmatmul.mubr.f32.gmra.mxu0 %v1712
    %v1780 = vpop.f32.mrf.mxu0
    %v1781 = vadd.f32 0.0, %v1780
    %v1782 = vpop.f32.mrf.mxu0
    %v1783 = vadd.f32 0.0, %v1782
    %1784 = vdwg.mxu0
    %1785 = vmatprep.subr.mxu0 %v572
    %1786 = vmatpush1.msra.mxu0 %v571
    %1787 = vmatprep.subr.mxu0 %v568
    %1788 = vmatpush1.msra.mxu0 %v567
    %1789 = vmatprep.subr.mxu0 %v564
    %1790 = vmatpush1.msra.mxu0 %v563
    %1791 = vmatprep.subr.mxu0 %v560
    %1792 = vmatpush1.msra.mxu0 %v559
    %1793 = vmatprep.subr.mxu0 %v556
    %1794 = vmatpush1.msra.mxu0 %v555
    %1795 = vmatprep.subr.mxu0 %v552
    %1796 = vmatpush1.msra.mxu0 %v551
    %1797 = vmatprep.subr.mxu0 %v548
    %1798 = vmatpush1.msra.mxu0 %v547
    %1799 = vmatprep.subr.mxu0 %v544
    %1800 = vmatpush1.msra.mxu0 %v543
    %1801 = vmatprep.subr.mxu0 %v540
    %1802 = vmatpush1.msra.mxu0 %v539
    %1803 = vmatprep.subr.mxu0 %v536
    %1804 = vmatpush1.msra.mxu0 %v535
    %1805 = vmatprep.subr.mxu0 %v532
    %1806 = vmatpush1.msra.mxu0 %v531
    %1807 = vmatprep.subr.mxu0 %v528
    %1808 = vmatpush1.msra.mxu0 %v527
    %1809 = vmatprep.subr.mxu0 %v524
    %1810 = vmatpush1.msra.mxu0 %v523
    %1811 = vmatprep.subr.mxu0 %v520
    %1812 = vmatpush1.msra.mxu0 %v519
    %1813 = vmatprep.subr.mxu0 %v516
    %1814 = vmatpush1.msra.mxu0 %v515
    %1815 = vmatprep.subr.mxu0 %v512
    %1816 = vmatpush1.msra.mxu0 %v511
    %1817 = vmatprep.subr.mxu0 0.0
    %1818 = vmatpush2.msra.mxu0 0.0
    %1819 = vmatprep.subr.mxu0 0.0
    %1820 = vmatpush2.msra.mxu0 0.0
    %1821 = vmatprep.subr.mxu0 0.0
    %1822 = vmatpush2.msra.mxu0 0.0
    %1823 = vmatprep.subr.mxu0 0.0
    %1824 = vmatpush2.msra.mxu0 0.0
    %1825 = vmatprep.subr.mxu0 0.0
    %1826 = vmatpush2.msra.mxu0 0.0
    %1827 = vmatprep.subr.mxu0 0.0
    %1828 = vmatpush2.msra.mxu0 0.0
    %1829 = vmatprep.subr.mxu0 0.0
    %1830 = vmatpush2.msra.mxu0 0.0
    %1831 = vmatprep.subr.mxu0 0.0
    %1832 = vmatpush2.msra.mxu0 0.0
    %1833 = vmatprep.subr.mxu0 0.0
    %1834 = vmatpush2.msra.mxu0 0.0
    %1835 = vmatprep.subr.mxu0 0.0
    %1836 = vmatpush2.msra.mxu0 0.0
    %1837 = vmatprep.subr.mxu0 0.0
    %1838 = vmatpush2.msra.mxu0 0.0
    %1839 = vmatprep.subr.mxu0 0.0
    %1840 = vmatpush2.msra.mxu0 0.0
    %1841 = vmatprep.subr.mxu0 0.0
    %1842 = vmatpush2.msra.mxu0 0.0
    %1843 = vmatprep.subr.mxu0 0.0
    %1844 = vmatpush2.msra.mxu0 0.0
    %1845 = vmatprep.subr.mxu0 0.0
    %1846 = vmatpush2.msra.mxu0 0.0
    %1847 = vmatprep.subr.mxu0 0.0
    %1848 = vmatpush2.msra.mxu0 0.0
    %1849 = vmatprep.mubr.f32.mxu0 0.0
    %1850 = vmatmul.mubr.f32.gmra.mxu0 %v1712
    %v1851 = vpop.f32.mrf.mxu0
    %v1852 = vadd.f32 0.0, %v1851
    %v1853 = vpop.f32.mrf.mxu0
    %v1854 = vadd.f32 0.0, %v1853
    %1855 = vdwg.mxu0
    %v1860 = vrot.slane %v1781, 3
    %v1861 = vrot.slane %v1783, 3
    %v1862 = vrot.slane %v1852, 3
    %v1863 = vrot.slane %v1854, 3
    %v1864 = vrot.slane %v1781, 4
    %v1865 = vrot.slane %v1783, 4
    %v1866 = vrot.slane %v1852, 4
    %v1867 = vrot.slane %v1854, 4
    %v1876 = vadd.f32 %v458, %v1860
    %v1877 = vadd.f32 %v460, %v1861
    %v1878 = vadd.f32 %v501, %v1862
    %v1879 = vadd.f32 %v503, %v1863
    %v1880 = vadd.f32 %v462, %v1864
    %v1881 = vadd.f32 %v464, %v1865
    %v1882 = vadd.f32 %v505, %v1866
    %v1883 = vadd.f32 %v507, %v1867
    %v1884 = vxor.u32 %v1876, 2147483648
    %v1885 = vxor.u32 %v1877, 2147483648
    %v1886 = vxor.u32 %v1878, 2147483648
    %v1887 = vxor.u32 %v1880, 2147483648
    %v1888 = vxor.u32 %v1881, 2147483648
    %v1889 = vxor.u32 %v1882, 2147483648
    %v1890 = vmul.f32 %v1884, 1.442695
    %v1891 = vpow.pop %v1890
    %v1892 = vmul.f32 %v1885, 1.442695
    %v1893 = vpow.pop %v1892
    %v1894 = vmul.f32 %v1886, 1.442695
    %v1895 = vpow.pop %v1894
    %v1896 = vmul.f32 %v1887, 1.442695
    %v1897 = vpow.pop %v1896
    %v1898 = vmul.f32 %v1888, 1.442695
    %v1899 = vpow.pop %v1898
    %v1900 = vmul.f32 %v1889, 1.442695
    %v1901 = vpow.pop %v1900
    %v1902 = vadd.f32 %v1891, 1.0
    %v1903 = vadd.f32 %v1893, 1.0
    %v1904 = vadd.f32 %v1895, 1.0
    %v1905 = vadd.f32 %v1897, 1.0
    %v1906 = vadd.f32 %v1899, 1.0
    %v1907 = vadd.f32 %v1901, 1.0
    %v1908 = vrcp.pop %v1902
    %v1909 = vmul.f32 1.0, %v1908
    %v1910 = vrcp.pop %v1903
    %v1911 = vmul.f32 1.0, %v1910
    %v1912 = vrcp.pop %v1904
    %v1913 = vmul.f32 1.0, %v1912
    %v1914 = vrcp.pop %v1905
    %v1915 = vmul.f32 1.0, %v1914
    %v1916 = vrcp.pop %v1906
    %v1917 = vmul.f32 1.0, %v1916
    %v1918 = vrcp.pop %v1907
    %v1919 = vmul.f32 1.0, %v1918
    %v1920 = vtanh.pop %v1879
    %v1921 = vtanh.pop %v1883
    %v1924 = vrot.slane %v1702, 7
    %v1925 = vrot.slane %v1703, 7
    %v1928 = vmul.f32 %v1911, %v1924
    %v1929 = vmul.f32 %v1917, %v1925
    %v1930 = vmul.f32 %v1909, %v1920
    %v1931 = vmul.f32 %v1915, %v1921
    %v1932 = vadd.f32 %v1928, %v1930
    %v1933 = vadd.f32 %v1929, %v1931
    %v1934 = vtanh.pop %v1932
    %v1935 = vtanh.pop %v1933
    %v1936 = vmul.f32 %v1913, %v1934
    %v1937 = vmul.f32 %v1919, %v1935
    %v1940 = vrot.slane %v1936, 5
    %v1941 = vrot.slane %v1937, 4
    %v1942 = vsel %vm796, %v1941, %v1940
    %1944 = vmatprep.subr.mxu0 %v570
    %1945 = vmatpush1.msra.mxu0 %v569
    %1946 = vmatprep.subr.mxu0 %v566
    %1947 = vmatpush1.msra.mxu0 %v565
    %1948 = vmatprep.subr.mxu0 %v562
    %1949 = vmatpush1.msra.mxu0 %v561
    %1950 = vmatprep.subr.mxu0 %v558
    %1951 = vmatpush1.msra.mxu0 %v557
    %1952 = vmatprep.subr.mxu0 %v554
    %1953 = vmatpush1.msra.mxu0 %v553
    %1954 = vmatprep.subr.mxu0 %v550
    %1955 = vmatpush1.msra.mxu0 %v549
    %1956 = vmatprep.subr.mxu0 %v546
    %1957 = vmatpush1.msra.mxu0 %v545
    %1958 = vmatprep.subr.mxu0 %v542
    %1959 = vmatpush1.msra.mxu0 %v541
    %1960 = vmatprep.subr.mxu0 %v538
    %1961 = vmatpush1.msra.mxu0 %v537
    %1962 = vmatprep.subr.mxu0 %v534
    %1963 = vmatpush1.msra.mxu0 %v533
    %1964 = vmatprep.subr.mxu0 %v530
    %1965 = vmatpush1.msra.mxu0 %v529
    %1966 = vmatprep.subr.mxu0 %v526
    %1967 = vmatpush1.msra.mxu0 %v525
    %1968 = vmatprep.subr.mxu0 %v522
    %1969 = vmatpush1.msra.mxu0 %v521
    %1970 = vmatprep.subr.mxu0 %v518
    %1971 = vmatpush1.msra.mxu0 %v517
    %1972 = vmatprep.subr.mxu0 %v514
    %1973 = vmatpush1.msra.mxu0 %v513
    %1974 = vmatprep.subr.mxu0 %v510
    %1975 = vmatpush1.msra.mxu0 %v509
    %1976 = vmatprep.subr.mxu0 0.0
    %1977 = vmatpush2.msra.mxu0 0.0
    %1978 = vmatprep.subr.mxu0 0.0
    %1979 = vmatpush2.msra.mxu0 0.0
    %1980 = vmatprep.subr.mxu0 0.0
    %1981 = vmatpush2.msra.mxu0 0.0
    %1982 = vmatprep.subr.mxu0 0.0
    %1983 = vmatpush2.msra.mxu0 0.0
    %1984 = vmatprep.subr.mxu0 0.0
    %1985 = vmatpush2.msra.mxu0 0.0
    %1986 = vmatprep.subr.mxu0 0.0
    %1987 = vmatpush2.msra.mxu0 0.0
    %1988 = vmatprep.subr.mxu0 0.0
    %1989 = vmatpush2.msra.mxu0 0.0
    %1990 = vmatprep.subr.mxu0 0.0
    %1991 = vmatpush2.msra.mxu0 0.0
    %1992 = vmatprep.subr.mxu0 0.0
    %1993 = vmatpush2.msra.mxu0 0.0
    %1994 = vmatprep.subr.mxu0 0.0
    %1995 = vmatpush2.msra.mxu0 0.0
    %1996 = vmatprep.subr.mxu0 0.0
    %1997 = vmatpush2.msra.mxu0 0.0
    %1998 = vmatprep.subr.mxu0 0.0
    %1999 = vmatpush2.msra.mxu0 0.0
    %2000 = vmatprep.subr.mxu0 0.0
    %2001 = vmatpush2.msra.mxu0 0.0
    %2002 = vmatprep.subr.mxu0 0.0
    %2003 = vmatpush2.msra.mxu0 0.0
    %2004 = vmatprep.subr.mxu0 0.0
    %2005 = vmatpush2.msra.mxu0 0.0
    %2006 = vmatprep.subr.mxu0 0.0
    %2007 = vmatpush2.msra.mxu0 0.0
    %2008 = vmatprep.mubr.f32.mxu0 0.0
    %2009 = vmatmul.mubr.f32.gmra.mxu0 %v1942
    %v2010 = vpop.f32.mrf.mxu0
    %v2011 = vadd.f32 0.0, %v2010
    %v2012 = vpop.f32.mrf.mxu0
    %v2013 = vadd.f32 0.0, %v2012
    %2014 = vdwg.mxu0
    %2015 = vmatprep.subr.mxu0 %v572
    %2016 = vmatpush1.msra.mxu0 %v571
    %2017 = vmatprep.subr.mxu0 %v568
    %2018 = vmatpush1.msra.mxu0 %v567
    %2019 = vmatprep.subr.mxu0 %v564
    %2020 = vmatpush1.msra.mxu0 %v563
    %2021 = vmatprep.subr.mxu0 %v560
    %2022 = vmatpush1.msra.mxu0 %v559
    %2023 = vmatprep.subr.mxu0 %v556
    %2024 = vmatpush1.msra.mxu0 %v555
    %2025 = vmatprep.subr.mxu0 %v552
    %2026 = vmatpush1.msra.mxu0 %v551
    %2027 = vmatprep.subr.mxu0 %v548
    %2028 = vmatpush1.msra.mxu0 %v547
    %2029 = vmatprep.subr.mxu0 %v544
    %2030 = vmatpush1.msra.mxu0 %v543
    %2031 = vmatprep.subr.mxu0 %v540
    %2032 = vmatpush1.msra.mxu0 %v539
    %2033 = vmatprep.subr.mxu0 %v536
    %2034 = vmatpush1.msra.mxu0 %v535
    %2035 = vmatprep.subr.mxu0 %v532
    %2036 = vmatpush1.msra.mxu0 %v531
    %2037 = vmatprep.subr.mxu0 %v528
    %2038 = vmatpush1.msra.mxu0 %v527
    %2039 = vmatprep.subr.mxu0 %v524
    %2040 = vmatpush1.msra.mxu0 %v523
    %2041 = vmatprep.subr.mxu0 %v520
    %2042 = vmatpush1.msra.mxu0 %v519
    %2043 = vmatprep.subr.mxu0 %v516
    %2044 = vmatpush1.msra.mxu0 %v515
    %2045 = vmatprep.subr.mxu0 %v512
    %2046 = vmatpush1.msra.mxu0 %v511
    %2047 = vmatprep.subr.mxu0 0.0
    %2048 = vmatpush2.msra.mxu0 0.0
    %2049 = vmatprep.subr.mxu0 0.0
    %2050 = vmatpush2.msra.mxu0 0.0
    %2051 = vmatprep.subr.mxu0 0.0
    %2052 = vmatpush2.msra.mxu0 0.0
    %2053 = vmatprep.subr.mxu0 0.0
    %2054 = vmatpush2.msra.mxu0 0.0
    %2055 = vmatprep.subr.mxu0 0.0
    %2056 = vmatpush2.msra.mxu0 0.0
    %2057 = vmatprep.subr.mxu0 0.0
    %2058 = vmatpush2.msra.mxu0 0.0
    %2059 = vmatprep.subr.mxu0 0.0
    %2060 = vmatpush2.msra.mxu0 0.0
    %2061 = vmatprep.subr.mxu0 0.0
    %2062 = vmatpush2.msra.mxu0 0.0
    %2063 = vmatprep.subr.mxu0 0.0
    %2064 = vmatpush2.msra.mxu0 0.0
    %2065 = vmatprep.subr.mxu0 0.0
    %2066 = vmatpush2.msra.mxu0 0.0
    %2067 = vmatprep.subr.mxu0 0.0
    %2068 = vmatpush2.msra.mxu0 0.0
    %2069 = vmatprep.subr.mxu0 0.0
    %2070 = vmatpush2.msra.mxu0 0.0
    %2071 = vmatprep.subr.mxu0 0.0
    %2072 = vmatpush2.msra.mxu0 0.0
    %2073 = vmatprep.subr.mxu0 0.0
    %2074 = vmatpush2.msra.mxu0 0.0
    %2075 = vmatprep.subr.mxu0 0.0
    %2076 = vmatpush2.msra.mxu0 0.0
    %2077 = vmatprep.subr.mxu0 0.0
    %2078 = vmatpush2.msra.mxu0 0.0
    %2079 = vmatprep.mubr.f32.mxu0 0.0
    %2080 = vmatmul.mubr.f32.gmra.mxu0 %v1942
    %v2081 = vpop.f32.mrf.mxu0
    %v2082 = vadd.f32 0.0, %v2081
    %v2083 = vpop.f32.mrf.mxu0
    %v2084 = vadd.f32 0.0, %v2083
    %2085 = vdwg.mxu0
    %v2090 = vrot.slane %v2011, 2
    %v2091 = vrot.slane %v2013, 2
    %v2092 = vrot.slane %v2082, 2
    %v2093 = vrot.slane %v2084, 2
    %v2094 = vrot.slane %v2011, 3
    %v2095 = vrot.slane %v2013, 3
    %v2096 = vrot.slane %v2082, 3
    %v2097 = vrot.slane %v2084, 3
    %v2106 = vadd.f32 %v458, %v2090
    %v2107 = vadd.f32 %v460, %v2091
    %v2108 = vadd.f32 %v501, %v2092
    %v2109 = vadd.f32 %v503, %v2093
    %v2110 = vadd.f32 %v462, %v2094
    %v2111 = vadd.f32 %v464, %v2095
    %v2112 = vadd.f32 %v505, %v2096
    %v2113 = vadd.f32 %v507, %v2097
    %v2114 = vxor.u32 %v2106, 2147483648
    %v2115 = vxor.u32 %v2107, 2147483648
    %v2116 = vxor.u32 %v2108, 2147483648
    %v2117 = vxor.u32 %v2110, 2147483648
    %v2118 = vxor.u32 %v2111, 2147483648
    %v2119 = vxor.u32 %v2112, 2147483648
    %v2120 = vmul.f32 %v2114, 1.442695
    %v2121 = vpow.pop %v2120
    %v2122 = vmul.f32 %v2115, 1.442695
    %v2123 = vpow.pop %v2122
    %v2124 = vmul.f32 %v2116, 1.442695
    %v2125 = vpow.pop %v2124
    %v2126 = vmul.f32 %v2117, 1.442695
    %v2127 = vpow.pop %v2126
    %v2128 = vmul.f32 %v2118, 1.442695
    %v2129 = vpow.pop %v2128
    %v2130 = vmul.f32 %v2119, 1.442695
    %v2131 = vpow.pop %v2130
    %v2132 = vadd.f32 %v2121, 1.0
    %v2133 = vadd.f32 %v2123, 1.0
    %v2134 = vadd.f32 %v2125, 1.0
    %v2135 = vadd.f32 %v2127, 1.0
    %v2136 = vadd.f32 %v2129, 1.0
    %v2137 = vadd.f32 %v2131, 1.0
    %v2138 = vrcp.pop %v2132
    %v2139 = vmul.f32 1.0, %v2138
    %v2140 = vrcp.pop %v2133
    %v2141 = vmul.f32 1.0, %v2140
    %v2142 = vrcp.pop %v2134
    %v2143 = vmul.f32 1.0, %v2142
    %v2144 = vrcp.pop %v2135
    %v2145 = vmul.f32 1.0, %v2144
    %v2146 = vrcp.pop %v2136
    %v2147 = vmul.f32 1.0, %v2146
    %v2148 = vrcp.pop %v2137
    %v2149 = vmul.f32 1.0, %v2148
    %v2150 = vtanh.pop %v2109
    %v2151 = vtanh.pop %v2113
    %v2154 = vrot.slane %v1932, 7
    %v2155 = vrot.slane %v1933, 7
    %v2158 = vmul.f32 %v2141, %v2154
    %v2159 = vmul.f32 %v2147, %v2155
    %v2160 = vmul.f32 %v2139, %v2150
    %v2161 = vmul.f32 %v2145, %v2151
    %v2162 = vadd.f32 %v2158, %v2160
    %v2163 = vadd.f32 %v2159, %v2161
    %v2164 = vtanh.pop %v2162
    %v2165 = vtanh.pop %v2163
    %v2166 = vmul.f32 %v2143, %v2164
    %v2167 = vmul.f32 %v2149, %v2165
    %v2170 = vrot.slane %v2166, 6
    %v2171 = vrot.slane %v2167, 5
    %v2172 = vsel %vm796, %v2171, %v2170
    %2174 = vmatprep.subr.mxu0 %v570
    %2175 = vmatpush1.msra.mxu0 %v569
    %2176 = vmatprep.subr.mxu0 %v566
    %2177 = vmatpush1.msra.mxu0 %v565
    %2178 = vmatprep.subr.mxu0 %v562
    %2179 = vmatpush1.msra.mxu0 %v561
    %2180 = vmatprep.subr.mxu0 %v558
    %2181 = vmatpush1.msra.mxu0 %v557
    %2182 = vmatprep.subr.mxu0 %v554
    %2183 = vmatpush1.msra.mxu0 %v553
    %2184 = vmatprep.subr.mxu0 %v550
    %2185 = vmatpush1.msra.mxu0 %v549
    %2186 = vmatprep.subr.mxu0 %v546
    %2187 = vmatpush1.msra.mxu0 %v545
    %2188 = vmatprep.subr.mxu0 %v542
    %2189 = vmatpush1.msra.mxu0 %v541
    %2190 = vmatprep.subr.mxu0 %v538
    %2191 = vmatpush1.msra.mxu0 %v537
    %2192 = vmatprep.subr.mxu0 %v534
    %2193 = vmatpush1.msra.mxu0 %v533
    %2194 = vmatprep.subr.mxu0 %v530
    %2195 = vmatpush1.msra.mxu0 %v529
    %2196 = vmatprep.subr.mxu0 %v526
    %2197 = vmatpush1.msra.mxu0 %v525
    %2198 = vmatprep.subr.mxu0 %v522
    %2199 = vmatpush1.msra.mxu0 %v521
    %2200 = vmatprep.subr.mxu0 %v518
    %2201 = vmatpush1.msra.mxu0 %v517
    %2202 = vmatprep.subr.mxu0 %v514
    %2203 = vmatpush1.msra.mxu0 %v513
    %2204 = vmatprep.subr.mxu0 %v510
    %2205 = vmatpush1.msra.mxu0 %v509
    %2206 = vmatprep.subr.mxu0 0.0
    %2207 = vmatpush2.msra.mxu0 0.0
    %2208 = vmatprep.subr.mxu0 0.0
    %2209 = vmatpush2.msra.mxu0 0.0
    %2210 = vmatprep.subr.mxu0 0.0
    %2211 = vmatpush2.msra.mxu0 0.0
    %2212 = vmatprep.subr.mxu0 0.0
    %2213 = vmatpush2.msra.mxu0 0.0
    %2214 = vmatprep.subr.mxu0 0.0
    %2215 = vmatpush2.msra.mxu0 0.0
    %2216 = vmatprep.subr.mxu0 0.0
    %2217 = vmatpush2.msra.mxu0 0.0
    %2218 = vmatprep.subr.mxu0 0.0
    %2219 = vmatpush2.msra.mxu0 0.0
    %2220 = vmatprep.subr.mxu0 0.0
    %2221 = vmatpush2.msra.mxu0 0.0
    %2222 = vmatprep.subr.mxu0 0.0
    %2223 = vmatpush2.msra.mxu0 0.0
    %2224 = vmatprep.subr.mxu0 0.0
    %2225 = vmatpush2.msra.mxu0 0.0
    %2226 = vmatprep.subr.mxu0 0.0
    %2227 = vmatpush2.msra.mxu0 0.0
    %2228 = vmatprep.subr.mxu0 0.0
    %2229 = vmatpush2.msra.mxu0 0.0
    %2230 = vmatprep.subr.mxu0 0.0
    %2231 = vmatpush2.msra.mxu0 0.0
    %2232 = vmatprep.subr.mxu0 0.0
    %2233 = vmatpush2.msra.mxu0 0.0
    %2234 = vmatprep.subr.mxu0 0.0
    %2235 = vmatpush2.msra.mxu0 0.0
    %2236 = vmatprep.subr.mxu0 0.0
    %2237 = vmatpush2.msra.mxu0 0.0
    %2238 = vmatprep.mubr.f32.mxu0 0.0
    %2239 = vmatmul.mubr.f32.gmra.mxu0 %v2172
    %v2240 = vpop.f32.mrf.mxu0
    %v2241 = vadd.f32 0.0, %v2240
    %v2242 = vpop.f32.mrf.mxu0
    %v2243 = vadd.f32 0.0, %v2242
    %2244 = vdwg.mxu0
    %2245 = vmatprep.subr.mxu0 %v572
    %2246 = vmatpush1.msra.mxu0 %v571
    %2247 = vmatprep.subr.mxu0 %v568
    %2248 = vmatpush1.msra.mxu0 %v567
    %2249 = vmatprep.subr.mxu0 %v564
    %2250 = vmatpush1.msra.mxu0 %v563
    %2251 = vmatprep.subr.mxu0 %v560
    %2252 = vmatpush1.msra.mxu0 %v559
    %2253 = vmatprep.subr.mxu0 %v556
    %2254 = vmatpush1.msra.mxu0 %v555
    %2255 = vmatprep.subr.mxu0 %v552
    %2256 = vmatpush1.msra.mxu0 %v551
    %2257 = vmatprep.subr.mxu0 %v548
    %2258 = vmatpush1.msra.mxu0 %v547
    %2259 = vmatprep.subr.mxu0 %v544
    %2260 = vmatpush1.msra.mxu0 %v543
    %2261 = vmatprep.subr.mxu0 %v540
    %2262 = vmatpush1.msra.mxu0 %v539
    %2263 = vmatprep.subr.mxu0 %v536
    %2264 = vmatpush1.msra.mxu0 %v535
    %2265 = vmatprep.subr.mxu0 %v532
    %2266 = vmatpush1.msra.mxu0 %v531
    %2267 = vmatprep.subr.mxu0 %v528
    %2268 = vmatpush1.msra.mxu0 %v527
    %2269 = vmatprep.subr.mxu0 %v524
    %2270 = vmatpush1.msra.mxu0 %v523
    %2271 = vmatprep.subr.mxu0 %v520
    %2272 = vmatpush1.msra.mxu0 %v519
    %2273 = vmatprep.subr.mxu0 %v516
    %2274 = vmatpush1.msra.mxu0 %v515
    %2275 = vmatprep.subr.mxu0 %v512
    %2276 = vmatpush1.msra.mxu0 %v511
    %2277 = vmatprep.subr.mxu0 0.0
    %2278 = vmatpush2.msra.mxu0 0.0
    %2279 = vmatprep.subr.mxu0 0.0
    %2280 = vmatpush2.msra.mxu0 0.0
    %2281 = vmatprep.subr.mxu0 0.0
    %2282 = vmatpush2.msra.mxu0 0.0
    %2283 = vmatprep.subr.mxu0 0.0
    %2284 = vmatpush2.msra.mxu0 0.0
    %2285 = vmatprep.subr.mxu0 0.0
    %2286 = vmatpush2.msra.mxu0 0.0
    %2287 = vmatprep.subr.mxu0 0.0
    %2288 = vmatpush2.msra.mxu0 0.0
    %2289 = vmatprep.subr.mxu0 0.0
    %2290 = vmatpush2.msra.mxu0 0.0
    %2291 = vmatprep.subr.mxu0 0.0
    %2292 = vmatpush2.msra.mxu0 0.0
    %2293 = vmatprep.subr.mxu0 0.0
    %2294 = vmatpush2.msra.mxu0 0.0
    %2295 = vmatprep.subr.mxu0 0.0
    %2296 = vmatpush2.msra.mxu0 0.0
    %2297 = vmatprep.subr.mxu0 0.0
    %2298 = vmatpush2.msra.mxu0 0.0
    %2299 = vmatprep.subr.mxu0 0.0
    %2300 = vmatpush2.msra.mxu0 0.0
    %2301 = vmatprep.subr.mxu0 0.0
    %2302 = vmatpush2.msra.mxu0 0.0
    %2303 = vmatprep.subr.mxu0 0.0
    %2304 = vmatpush2.msra.mxu0 0.0
    %2305 = vmatprep.subr.mxu0 0.0
    %2306 = vmatpush2.msra.mxu0 0.0
    %2307 = vmatprep.subr.mxu0 0.0
    %2308 = vmatpush2.msra.mxu0 0.0
    %2309 = vmatprep.mubr.f32.mxu0 0.0
    %2310 = vmatmul.mubr.f32.gmra.mxu0 %v2172
    %v2311 = vpop.f32.mrf.mxu0
    %v2312 = vadd.f32 0.0, %v2311
    %v2313 = vpop.f32.mrf.mxu0
    %v2314 = vadd.f32 0.0, %v2313
    %2315 = vdwg.mxu0
    %v2320 = vrot.slane %v2241, 1
    %v2321 = vrot.slane %v2243, 1
    %v2322 = vrot.slane %v2312, 1
    %v2323 = vrot.slane %v2314, 1
    %v2324 = vrot.slane %v2241, 2
    %v2325 = vrot.slane %v2243, 2
    %v2326 = vrot.slane %v2312, 2
    %v2327 = vrot.slane %v2314, 2
    %v2336 = vadd.f32 %v458, %v2320
    %v2337 = vadd.f32 %v460, %v2321
    %v2338 = vadd.f32 %v501, %v2322
    %v2339 = vadd.f32 %v503, %v2323
    %v2340 = vadd.f32 %v462, %v2324
    %v2341 = vadd.f32 %v464, %v2325
    %v2342 = vadd.f32 %v505, %v2326
    %v2343 = vadd.f32 %v507, %v2327
    %v2344 = vxor.u32 %v2336, 2147483648
    %v2345 = vxor.u32 %v2337, 2147483648
    %v2346 = vxor.u32 %v2338, 2147483648
    %v2347 = vxor.u32 %v2340, 2147483648
    %v2348 = vxor.u32 %v2341, 2147483648
    %v2349 = vxor.u32 %v2342, 2147483648
    %v2350 = vmul.f32 %v2344, 1.442695
    %v2351 = vpow.pop %v2350
    %v2352 = vmul.f32 %v2345, 1.442695
    %v2353 = vpow.pop %v2352
    %v2354 = vmul.f32 %v2346, 1.442695
    %v2355 = vpow.pop %v2354
    %v2356 = vmul.f32 %v2347, 1.442695
    %v2357 = vpow.pop %v2356
    %v2358 = vmul.f32 %v2348, 1.442695
    %v2359 = vpow.pop %v2358
    %v2360 = vmul.f32 %v2349, 1.442695
    %v2361 = vpow.pop %v2360
    %v2362 = vadd.f32 %v2351, 1.0
    %v2363 = vadd.f32 %v2353, 1.0
    %v2364 = vadd.f32 %v2355, 1.0
    %v2365 = vadd.f32 %v2357, 1.0
    %v2366 = vadd.f32 %v2359, 1.0
    %v2367 = vadd.f32 %v2361, 1.0
    %v2368 = vrcp.pop %v2362
    %v2369 = vmul.f32 1.0, %v2368
    %v2370 = vrcp.pop %v2363
    %v2371 = vmul.f32 1.0, %v2370
    %v2372 = vrcp.pop %v2364
    %v2373 = vmul.f32 1.0, %v2372
    %v2374 = vrcp.pop %v2365
    %v2375 = vmul.f32 1.0, %v2374
    %v2376 = vrcp.pop %v2366
    %v2377 = vmul.f32 1.0, %v2376
    %v2378 = vrcp.pop %v2367
    %v2379 = vmul.f32 1.0, %v2378
    %v2380 = vtanh.pop %v2339
    %v2381 = vtanh.pop %v2343
    %v2384 = vrot.slane %v2162, 7
    %v2385 = vrot.slane %v2163, 7
    %v2388 = vmul.f32 %v2371, %v2384
    %v2389 = vmul.f32 %v2377, %v2385
    %v2390 = vmul.f32 %v2369, %v2380
    %v2391 = vmul.f32 %v2375, %v2381
    %v2392 = vadd.f32 %v2388, %v2390
    %v2393 = vadd.f32 %v2389, %v2391
    %v2394 = vtanh.pop %v2392
    %v2395 = vtanh.pop %v2393
    %v2396 = vmul.f32 %v2373, %v2394
    %v2397 = vmul.f32 %v2379, %v2395
    %v2400 = vrot.slane %v2397, 7
    %2403 = vst [vmem:[#allocation2 - $0x7] sm:$0x80] %v2396
    %2404 = vst [vmem:[#allocation2 + $0x1] sm:$0x1] %v2400
    %v2407 = vrot.slane %v2393, 7
    %2410 = vst [vmem:[#allocation3 - $0x7] sm:$0x80] %v2392
    %2411 = vst [vmem:[#allocation3 + $0x1] sm:$0x1] %v2407
    // Predicated region
    $region38: #{lstm_model_forward.1} parent=1 // pred_check
      %p2412 = pneg %p38
    $region39: #{lstm_model_forward.1} parent=1 // pred_check_branch
      %2414 = sbr.rel (%p2412) target = $region41
    $region40: #{lstm_model_forward.1} parent=1 // pred_region
      %v2415 = vld [vmem:[%s7] sm:$0xff]
      %v2416 = vld [vmem:[%s7 + $0x8] sm:$0xff]
      %v2417 = vld [vmem:[%s7 + $0x10] sm:$0xff]
      %v2418 = vld [vmem:[%s7 + $0x18] sm:$0xff]
      %v2419 = vld [vmem:[%s7 + $0x20] sm:$0xff]
      %v2420 = vld [vmem:[%s7 + $0x28] sm:$0xff]
      %v2421 = vld [vmem:[%s7 + $0x30] sm:$0xff]
      %v2422 = vld [vmem:[%s7 + $0x38] sm:$0xff]
      %v2423 = vld [vmem:[%s7 + $0x40] sm:$0xff]
      %v2424 = vld [vmem:[%s7 + $0x48] sm:$0xff]
      %v2425 = vld [vmem:[%s7 + $0x50] sm:$0xff]
      %v2426 = vld [vmem:[%s7 + $0x58] sm:$0xff]
      %v2427 = vld [vmem:[%s7 + $0x60] sm:$0xff]
      %v2428 = vld [vmem:[%s7 + $0x68] sm:$0xff]
      %v2429 = vld [vmem:[%s7 + $0x70] sm:$0xff]
      %v2430 = vld [vmem:[%s7 + $0x78] sm:$0xff]
      %v2431 = vld [vmem:[%s8] sm:$0x1]
      %v2433 = vlaneseq
      %v2434 = vshrl.u32 %v2433, 7
      %v2435 = vsub.s32 0, %v2434
      %v2436 = vrot.slane %v2431, %v2435
      %v2438 = vrot.slane %v2396, 7
      %v2439 = vrot.slane %v2397, 6
      %v2440 = vsel %vm796, %v2439, %v2438
      %2442 = vmatprep.subr.mxu0 0.0
      %2443 = vmatpush1.msra.mxu0 %v2430
      %2444 = vmatprep.subr.mxu0 0.0
      %2445 = vmatpush1.msra.mxu0 %v2429
      %2446 = vmatprep.subr.mxu0 0.0
      %2447 = vmatpush1.msra.mxu0 %v2428
      %2448 = vmatprep.subr.mxu0 0.0
      %2449 = vmatpush1.msra.mxu0 %v2427
      %2450 = vmatprep.subr.mxu0 0.0
      %2451 = vmatpush1.msra.mxu0 %v2426
      %2452 = vmatprep.subr.mxu0 0.0
      %2453 = vmatpush1.msra.mxu0 %v2425
      %2454 = vmatprep.subr.mxu0 0.0
      %2455 = vmatpush1.msra.mxu0 %v2424
      %2456 = vmatprep.subr.mxu0 0.0
      %2457 = vmatpush1.msra.mxu0 %v2423
      %2458 = vmatprep.subr.mxu0 0.0
      %2459 = vmatpush1.msra.mxu0 %v2422
      %2460 = vmatprep.subr.mxu0 0.0
      %2461 = vmatpush1.msra.mxu0 %v2421
      %2462 = vmatprep.subr.mxu0 0.0
      %2463 = vmatpush1.msra.mxu0 %v2420
      %2464 = vmatprep.subr.mxu0 0.0
      %2465 = vmatpush1.msra.mxu0 %v2419
      %2466 = vmatprep.subr.mxu0 0.0
      %2467 = vmatpush1.msra.mxu0 %v2418
      %2468 = vmatprep.subr.mxu0 0.0
      %2469 = vmatpush1.msra.mxu0 %v2417
      %2470 = vmatprep.subr.mxu0 0.0
      %2471 = vmatpush1.msra.mxu0 %v2416
      %2472 = vmatprep.subr.mxu0 0.0
      %2473 = vmatpush1.msra.mxu0 %v2415
      %2474 = vmatprep.subr.mxu0 0.0
      %2475 = vmatpush2.msra.mxu0 0.0
      %2476 = vmatprep.subr.mxu0 0.0
      %2477 = vmatpush2.msra.mxu0 0.0
      %2478 = vmatprep.subr.mxu0 0.0
      %2479 = vmatpush2.msra.mxu0 0.0
      %2480 = vmatprep.subr.mxu0 0.0
      %2481 = vmatpush2.msra.mxu0 0.0
      %2482 = vmatprep.subr.mxu0 0.0
      %2483 = vmatpush2.msra.mxu0 0.0
      %2484 = vmatprep.subr.mxu0 0.0
      %2485 = vmatpush2.msra.mxu0 0.0
      %2486 = vmatprep.subr.mxu0 0.0
      %2487 = vmatpush2.msra.mxu0 0.0
      %2488 = vmatprep.subr.mxu0 0.0
      %2489 = vmatpush2.msra.mxu0 0.0
      %2490 = vmatprep.subr.mxu0 0.0
      %2491 = vmatpush2.msra.mxu0 0.0
      %2492 = vmatprep.subr.mxu0 0.0
      %2493 = vmatpush2.msra.mxu0 0.0
      %2494 = vmatprep.subr.mxu0 0.0
      %2495 = vmatpush2.msra.mxu0 0.0
      %2496 = vmatprep.subr.mxu0 0.0
      %2497 = vmatpush2.msra.mxu0 0.0
      %2498 = vmatprep.subr.mxu0 0.0
      %2499 = vmatpush2.msra.mxu0 0.0
      %2500 = vmatprep.subr.mxu0 0.0
      %2501 = vmatpush2.msra.mxu0 0.0
      %2502 = vmatprep.subr.mxu0 0.0
      %2503 = vmatpush2.msra.mxu0 0.0
      %2504 = vmatprep.subr.mxu0 0.0
      %2505 = vmatpush2.msra.mxu0 0.0
      %2506 = vmatprep.mubr.f32.mxu0 0.0
      %2507 = vmatmul.mubr.f32.gmra.mxu0 %v2440
      %v2508 = vpop.f32.mrf.mxu0
      %v2509 = vadd.f32 %v2436, %v2508
      %v2510 = vpop.f32.mrf.mxu0
      %2511 = vdwg.mxu0
      %2512 = vst [vmem:[#allocation6] sm:$0x3] %v2509
    $region41: #{lstm_model_forward.1} parent=1 // pred_fallthru
      _
    // Predicated region
    $region42: #{lstm_model_forward.1} parent=1 // pred_check
      _
    $region43: #{lstm_model_forward.1} parent=1 // pred_check_branch
      %2514 = sbr.rel (0) target = $region45
    $region44: #{lstm_model_forward.1} parent=1 // pred_region
      %s2516 = ssub.s32 32, 32
      %2517 = vsyncadd [#allocation7], %s2516
      %s2519 = sshll.u32 [#allocation6], 4
      %s2520 = int_to_ptr.vmem [resolvable:$true] %s2519
      %2522 = dma.vmem_to_hbm [thread:$0]  %s2520, 32, %s9, [#allocation7]
    $region45: #{lstm_model_forward.1} parent=1 // pred_fallthru
      _
    // Predicated region
    $region46: #{lstm_model_forward.1} parent=1 // pred_check
      _
    $region47: #{lstm_model_forward.1} parent=1 // pred_check_branch
      %2524 = sbr.rel (0) target = $region49
    $region48: #{lstm_model_forward.1} parent=1 // pred_region
      %2525 = dma.done [#allocation7], 32
    $region49: #{lstm_model_forward.1} parent=1 // pred_fallthru
      _
    %2526 = vsyncpa [#allocation7], 1

</llo_original>
